<compile_context>
chip_gen: v5e
topology: v5e:2x2
jax: 0.10.0
libtpu: 0.0.40
codegen_flags: <defaults>
</compile_context>

<pallas_src>
import functools
import math

import jax
import jax.numpy as jnp
from jax.experimental import pallas as pl
from jax.experimental.pallas import tpu as pltpu


def _additive_attention_kernel(
    q_ref, k_ref, v_ref,
    wq_ref, bq_ref, wk_ref, bk_ref, wv_ref, bv_ref,
    wa_ref, ba_ref, wo_ref, bo_ref, e_ref,
    o_ref, attn_ref,
    *, inv_sqrt_depth,
):
    f32 = jnp.float32
    # Per-batch activation tiles (N, D).
    q = q_ref[0]
    k = k_ref[0]
    v = v_ref[0]

    # Linear projections on the MXU (f32 accumulation).
    qp = jnp.dot(q, wq_ref[...], preferred_element_type=f32) + bq_ref[...]
    kp = jnp.dot(k, wk_ref[...], preferred_element_type=f32) + bk_ref[...]
    vp = jnp.dot(v, wv_ref[...], preferred_element_type=f32) + bv_ref[...]

    # Attention logits per head; bias applied before the 1/sqrt(depth) scale (matches PyTorch).
    logits = (jnp.dot(qp, wa_ref[...], preferred_element_type=f32)
              + ba_ref[...]) * inv_sqrt_depth                      # (N, H)

    # Numerically-stable softmax over the sequence axis (axis 0), per head column.
    m = jnp.max(logits, axis=0, keepdims=True)                    # (1, H)  XLU reduce
    p = jnp.exp(logits - m)                                       # EUP
    s = jnp.sum(p, axis=0, keepdims=True)                         # (1, H)  XLU reduce
    attn = p / s                                                   # (N, H)
    attn_ref[0] = attn.astype(attn_ref.dtype)

    # Expand per-head weights across their depth columns (lane-dense, no reshape/transpose):
    #   attn_exp[n, h*depth + d] = attn[n, h]     with E[h, h*depth + d] = 1
    attn_exp = jnp.dot(attn, e_ref[...], preferred_element_type=f32)   # (N, D)  MXU

    # global_q in packed-head layout: attention-weighted sum over the sequence.
    gq = jnp.sum(attn_exp * qp, axis=0, keepdims=True)             # (1, D)  VPU + XLU

    # r = (global_q * k) * v (broadcast over N), then output projection.
    r = gq * kp * vp                                               # (N, D)
    out = jnp.dot(r, wo_ref[...], preferred_element_type=f32) + bo_ref[...]
    o_ref[0] = out.astype(o_ref.dtype)


def additive_attention(q, k, v, params, n_heads):
    """q, k, v: (B, N, D). Returns (output (B, N, D), attn (B, H, N))."""
    B, N, D = q.shape
    H = n_heads
    assert D % H == 0
    depth = D // H

    wq, bq = params["wq"], params["bq"]
    wk, bk = params["wk"], params["bk"]
    wv, bv = params["wv"], params["bv"]
    wa, ba = params["wa"], params["ba"]
    wo, bo = params["wo"], params["bo"]

    # Head-expansion matrix E[h, h*depth + d] = 1 (built once, VMEM-resident).
    expand = jnp.repeat(jnp.eye(H, dtype=q.dtype), depth, axis=1)   # (H, D)

    kernel = functools.partial(
        _additive_attention_kernel, inv_sqrt_depth=1.0 / math.sqrt(depth))

    def bcast2d(shape):
        # Constant index_map -> block DMA'd once and kept resident across the B grid steps.
        return pl.BlockSpec(shape, lambda b: (0, 0))

    per_batch = pl.BlockSpec((1, N, D), lambda b: (b, 0, 0))

    # Advisory cost hint for the XLA scheduler around the custom call.
    flops = B * (8 * N * D * D + 4 * N * D * H)
    bytes_accessed = 4 * (4 * B * N * D + B * N * H + 4 * D * D + 2 * D * H + 4 * D + H)
    cost = pl.CostEstimate(flops=flops, transcendentals=B * N * H,
                           bytes_accessed=bytes_accessed)

    out, attn_nh = pl.pallas_call(
        kernel,
        out_shape=(
            jax.ShapeDtypeStruct((B, N, D), q.dtype),
            jax.ShapeDtypeStruct((B, N, H), q.dtype),
        ),
        grid=(B,),
        in_specs=[
            per_batch, per_batch, per_batch,     # q, k, v
            bcast2d((D, D)), bcast2d((1, D)),    # Wq, bq
            bcast2d((D, D)), bcast2d((1, D)),    # Wk, bk
            bcast2d((D, D)), bcast2d((1, D)),    # Wv, bv
            bcast2d((D, H)), bcast2d((1, H)),    # Wa, ba
            bcast2d((D, D)), bcast2d((1, D)),    # Wo, bo
            bcast2d((H, D)),                     # head-expansion matrix
        ],
        out_specs=(
            pl.BlockSpec((1, N, D), lambda b: (b, 0, 0)),
            pl.BlockSpec((1, N, H), lambda b: (b, 0, 0)),
        ),
        compiler_params=pltpu.CompilerParams(
            dimension_semantics=("parallel",),
        ),
        cost_estimate=cost,
    )(
        q, k, v,
        wq, bq.reshape(1, D),
        wk, bk.reshape(1, D),
        wv, bv.reshape(1, D),
        wa, ba.reshape(1, H),
        wo, bo.reshape(1, D),
        expand,
    )
    # PyTorch returns attn as (B, H, N); the kernel writes the store-friendly (B, N, H)
    # slab and this layout-only transpose of a tiny array happens outside the kernel.
    return out, jnp.transpose(attn_nh, (0, 2, 1))


def additive_attention_ref(q, k, v, params, n_heads):
    """Pure-JAX reference mirroring the PyTorch module exactly."""
    B, N, D = q.shape
    H = n_heads
    depth = D // H
    qp = q @ params["wq"] + params["bq"]
    kp = k @ params["wk"] + params["bk"]
    vp = v @ params["wv"] + params["bv"]
    logits = (qp @ params["wa"] + params["ba"]) / math.sqrt(depth)    # (B, N, H)
    attn = jax.nn.softmax(jnp.transpose(logits, (0, 2, 1)), axis=-1)  # (B, H, N)

    def split(x):
        return jnp.transpose(x.reshape(B, N, H, depth), (0, 2, 1, 3))

    qh, kh, vh = split(qp), split(kp), split(vp)
    gq = jnp.einsum("bhn,bhnd->bhd", attn, qh)[:, :, None, :]
    r = gq * kh * vh
    r = jnp.transpose(r, (0, 2, 1, 3)).reshape(B, N, D)
    out = r @ params["wo"] + params["bo"]
    return out, attn


if __name__ == "__main__":
    # Small shapes consistent with the module (lane-dense model_dim).
    B, N, D, H = 2, 128, 128, 4   # batch, seq, model_dim, n_heads (depth = 32)

    key = jax.random.PRNGKey(0)
    ks = jax.random.split(key, 13)
    scale = 1.0 / math.sqrt(D)    # Linear-style init scale keeps activations O(1)

    q = jax.random.normal(ks[0], (B, N, D), jnp.float32)
    k = jax.random.normal(ks[1], (B, N, D), jnp.float32)
    v = jax.random.normal(ks[2], (B, N, D), jnp.float32)

    params = dict(
        wq=jax.random.normal(ks[3], (D, D), jnp.float32) * scale,
        bq=jax.random.normal(ks[4], (D,), jnp.float32) * scale,
        wk=jax.random.normal(ks[5], (D, D), jnp.float32) * scale,
        bk=jax.random.normal(ks[6], (D,), jnp.float32) * scale,
        wv=jax.random.normal(ks[7], (D, D), jnp.float32) * scale,
        bv=jax.random.normal(ks[8], (D,), jnp.float32) * scale,
        wa=jax.random.normal(ks[9], (D, H), jnp.float32) * scale,
        ba=jax.random.normal(ks[10], (H,), jnp.float32) * scale,
        wo=jax.random.normal(ks[11], (D, D), jnp.float32) * scale,
        bo=jax.random.normal(ks[12], (D,), jnp.float32) * scale,
    )

    out, attn = additive_attention(q, k, v, params, n_heads=H)
    out, attn = jax.block_until_ready((out, attn))

    with jax.default_matmul_precision("highest"):
        out_ref, attn_ref = additive_attention_ref(q, k, v, params, n_heads=H)

    assert out.shape == (B, N, D) and out.dtype == q.dtype
    assert attn.shape == (B, H, N)
    assert jnp.allclose(attn, attn_ref, atol=1e-4, rtol=1e-3), (
        float(jnp.max(jnp.abs(attn - attn_ref))))
    assert jnp.allclose(out, out_ref, atol=5e-3, rtol=5e-3), (
        float(jnp.max(jnp.abs(out - out_ref))))

    print("KERNEL_OK")
</pallas_src>

<mosaic_0001>
module attributes {stable_mosaic.version = 11 : i64} {
  func.func @_additive_attention_kernel(%arg0: i32, %arg1: memref<1x128x128xf32, #tpu.memory_space<vmem>>, %arg2: memref<1x128x128xf32, #tpu.memory_space<vmem>>, %arg3: memref<1x128x128xf32, #tpu.memory_space<vmem>>, %arg4: memref<128x128xf32, #tpu.memory_space<vmem>>, %arg5: memref<1x128xf32, #tpu.memory_space<vmem>>, %arg6: memref<128x128xf32, #tpu.memory_space<vmem>>, %arg7: memref<1x128xf32, #tpu.memory_space<vmem>>, %arg8: memref<128x128xf32, #tpu.memory_space<vmem>>, %arg9: memref<1x128xf32, #tpu.memory_space<vmem>>, %arg10: memref<128x4xf32, #tpu.memory_space<vmem>>, %arg11: memref<1x4xf32, #tpu.memory_space<vmem>>, %arg12: memref<128x128xf32, #tpu.memory_space<vmem>>, %arg13: memref<1x128xf32, #tpu.memory_space<vmem>>, %arg14: memref<4x128xf32, #tpu.memory_space<vmem>>, %arg15: memref<1x128x128xf32, #tpu.memory_space<vmem>>, %arg16: memref<1x128x4xf32, #tpu.memory_space<vmem>>) attributes {dimension_semantics = [#tpu.dimension_semantics<parallel>], iteration_bounds = array<i64: 2>, scalar_prefetch = 0 : i64, scratch_operands = 0 : i64, tpu.core_type = #tpu.core_type<tc>, window_params = [{transform_indices = @transform_0, window_bounds = array<i64: 1, 128, 128>}, {transform_indices = @transform_1, window_bounds = array<i64: 1, 128, 128>}, {transform_indices = @transform_2, window_bounds = array<i64: 1, 128, 128>}, {pipeline_mode = #tpu.pipeline_mode<synchronous>, transform_indices = @transform_3, window_bounds = array<i64: 128, 128>}, {pipeline_mode = #tpu.pipeline_mode<synchronous>, transform_indices = @transform_4, window_bounds = array<i64: 1, 128>}, {pipeline_mode = #tpu.pipeline_mode<synchronous>, transform_indices = @transform_5, window_bounds = array<i64: 128, 128>}, {pipeline_mode = #tpu.pipeline_mode<synchronous>, transform_indices = @transform_6, window_bounds = array<i64: 1, 128>}, {pipeline_mode = #tpu.pipeline_mode<synchronous>, transform_indices = @transform_7, window_bounds = array<i64: 128, 128>}, {pipeline_mode = #tpu.pipeline_mode<synchronous>, transform_indices = @transform_8, window_bounds = array<i64: 1, 128>}, {pipeline_mode = #tpu.pipeline_mode<synchronous>, transform_indices = @transform_9, window_bounds = array<i64: 128, 4>}, {pipeline_mode = #tpu.pipeline_mode<synchronous>, transform_indices = @transform_10, window_bounds = array<i64: 1, 4>}, {pipeline_mode = #tpu.pipeline_mode<synchronous>, transform_indices = @transform_11, window_bounds = array<i64: 128, 128>}, {pipeline_mode = #tpu.pipeline_mode<synchronous>, transform_indices = @transform_12, window_bounds = array<i64: 1, 128>}, {pipeline_mode = #tpu.pipeline_mode<synchronous>, transform_indices = @transform_13, window_bounds = array<i64: 4, 128>}, {transform_indices = @transform_14, window_bounds = array<i64: 1, 128, 128>}, {transform_indices = @transform_15, window_bounds = array<i64: 1, 128, 4>}]} {
    %c0 = arith.constant 0 : index
    %c0_0 = arith.constant 0 : index
    %c0_1 = arith.constant 0 : index
    %0 = vector.load %arg1[%c0, %c0_0, %c0_1] : memref<1x128x128xf32, #tpu.memory_space<vmem>>, vector<1x128x128xf32>
    %1 = vector.shape_cast %0 : vector<1x128x128xf32> to vector<128x128xf32>
    %c0_2 = arith.constant 0 : index
    %c0_3 = arith.constant 0 : index
    %c0_4 = arith.constant 0 : index
    %2 = vector.load %arg2[%c0_2, %c0_3, %c0_4] : memref<1x128x128xf32, #tpu.memory_space<vmem>>, vector<1x128x128xf32>
    %3 = vector.shape_cast %2 : vector<1x128x128xf32> to vector<128x128xf32>
    %c0_5 = arith.constant 0 : index
    %c0_6 = arith.constant 0 : index
    %c0_7 = arith.constant 0 : index
    %4 = vector.load %arg3[%c0_5, %c0_6, %c0_7] : memref<1x128x128xf32, #tpu.memory_space<vmem>>, vector<1x128x128xf32>
    %5 = vector.shape_cast %4 : vector<1x128x128xf32> to vector<128x128xf32>
    %c0_8 = arith.constant 0 : index
    %c0_9 = arith.constant 0 : index
    %6 = vector.load %arg4[%c0_8, %c0_9] : memref<128x128xf32, #tpu.memory_space<vmem>>, vector<128x128xf32>
    %cst = arith.constant dense<0.000000e+00> : vector<128x128xf32>
    %7 = tpu.matmul %1, %6, %cst {dimension_numbers = #tpu.dot_dimension_numbers<[1], [0], [0], [1], [0, 0, 1, 1], [], []>} : vector<128x128xf32>, vector<128x128xf32>, vector<128x128xf32> -> vector<128x128xf32>
    %c0_10 = arith.constant 0 : index
    %c0_11 = arith.constant 0 : index
    %8 = vector.load %arg5[%c0_10, %c0_11] : memref<1x128xf32, #tpu.memory_space<vmem>>, vector<1x128xf32>
    %9 = vector.broadcast %8 : vector<1x128xf32> to vector<128x128xf32>
    %10 = arith.addf %7, %9 : vector<128x128xf32>
    %c0_12 = arith.constant 0 : index
    %c0_13 = arith.constant 0 : index
    %11 = vector.load %arg6[%c0_12, %c0_13] : memref<128x128xf32, #tpu.memory_space<vmem>>, vector<128x128xf32>
    %cst_14 = arith.constant dense<0.000000e+00> : vector<128x128xf32>
    %12 = tpu.matmul %3, %11, %cst_14 {dimension_numbers = #tpu.dot_dimension_numbers<[1], [0], [0], [1], [0, 0, 1, 1], [], []>} : vector<128x128xf32>, vector<128x128xf32>, vector<128x128xf32> -> vector<128x128xf32>
    %c0_15 = arith.constant 0 : index
    %c0_16 = arith.constant 0 : index
    %13 = vector.load %arg7[%c0_15, %c0_16] : memref<1x128xf32, #tpu.memory_space<vmem>>, vector<1x128xf32>
    %14 = vector.broadcast %13 : vector<1x128xf32> to vector<128x128xf32>
    %15 = arith.addf %12, %14 : vector<128x128xf32>
    %c0_17 = arith.constant 0 : index
    %c0_18 = arith.constant 0 : index
    %16 = vector.load %arg8[%c0_17, %c0_18] : memref<128x128xf32, #tpu.memory_space<vmem>>, vector<128x128xf32>
    %cst_19 = arith.constant dense<0.000000e+00> : vector<128x128xf32>
    %17 = tpu.matmul %5, %16, %cst_19 {dimension_numbers = #tpu.dot_dimension_numbers<[1], [0], [0], [1], [0, 0, 1, 1], [], []>} : vector<128x128xf32>, vector<128x128xf32>, vector<128x128xf32> -> vector<128x128xf32>
    %c0_20 = arith.constant 0 : index
    %c0_21 = arith.constant 0 : index
    %18 = vector.load %arg9[%c0_20, %c0_21] : memref<1x128xf32, #tpu.memory_space<vmem>>, vector<1x128xf32>
    %19 = vector.broadcast %18 : vector<1x128xf32> to vector<128x128xf32>
    %20 = arith.addf %17, %19 : vector<128x128xf32>
    %c0_22 = arith.constant 0 : index
    %c0_23 = arith.constant 0 : index
    %21 = vector.load %arg10[%c0_22, %c0_23] : memref<128x4xf32, #tpu.memory_space<vmem>>, vector<128x4xf32>
    %cst_24 = arith.constant dense<0.000000e+00> : vector<128x4xf32>
    %22 = tpu.matmul %10, %21, %cst_24 {dimension_numbers = #tpu.dot_dimension_numbers<[1], [0], [0], [1], [0, 0, 1, 1], [], []>} : vector<128x128xf32>, vector<128x4xf32>, vector<128x4xf32> -> vector<128x4xf32>
    %c0_25 = arith.constant 0 : index
    %c0_26 = arith.constant 0 : index
    %23 = vector.load %arg11[%c0_25, %c0_26] : memref<1x4xf32, #tpu.memory_space<vmem>>, vector<1x4xf32>
    %24 = vector.broadcast %23 : vector<1x4xf32> to vector<128x4xf32>
    %25 = arith.addf %22, %24 : vector<128x4xf32>
    %cst_27 = arith.constant 0.176776692 : f32
    %26 = vector.broadcast %cst_27 : f32 to vector<128x4xf32>
    %27 = arith.mulf %25, %26 : vector<128x4xf32>
    %cst_28 = arith.constant dense<0xFF800000> : vector<4xf32>
    %28 = vector.multi_reduction <maximumf>, %27, %cst_28 [0] : vector<128x4xf32> to vector<4xf32>
    %29 = vector.shape_cast %28 : vector<4xf32> to vector<1x4xf32>
    %30 = vector.broadcast %29 : vector<1x4xf32> to vector<128x4xf32>
    %31 = arith.subf %27, %30 : vector<128x4xf32>
    %32 = math.exp %31 : vector<128x4xf32>
    %cst_29 = arith.constant dense<0.000000e+00> : vector<4xf32>
    %33 = vector.multi_reduction <add>, %32, %cst_29 [0] : vector<128x4xf32> to vector<4xf32>
    %34 = vector.shape_cast %33 : vector<4xf32> to vector<1x4xf32>
    %35 = vector.broadcast %34 : vector<1x4xf32> to vector<128x4xf32>
    %36 = arith.divf %32, %35 : vector<128x4xf32>
    %c0_30 = arith.constant 0 : index
    %c0_31 = arith.constant 0 : index
    %c0_32 = arith.constant 0 : index
    %37 = vector.load %arg16[%c0_30, %c0_31, %c0_32] : memref<1x128x4xf32, #tpu.memory_space<vmem>>, vector<1x128x4xf32>
    %38 = vector.shape_cast %37 : vector<1x128x4xf32> to vector<128x4xf32>
    %39 = vector.shape_cast %36 : vector<128x4xf32> to vector<1x128x4xf32>
    tpu.vector_store %arg16[%c0_30, %c0_31, %c0_32], %39 {strides = array<i32>} : memref<1x128x4xf32, #tpu.memory_space<vmem>>, vector<1x128x4xf32>,
    %c0_33 = arith.constant 0 : index
    %c0_34 = arith.constant 0 : index
    %40 = vector.load %arg14[%c0_33, %c0_34] : memref<4x128xf32, #tpu.memory_space<vmem>>, vector<4x128xf32>
    %cst_35 = arith.constant dense<0.000000e+00> : vector<128x128xf32>
    %41 = tpu.matmul %36, %40, %cst_35 {dimension_numbers = #tpu.dot_dimension_numbers<[1], [0], [0], [1], [0, 0, 1, 1], [], []>} : vector<128x4xf32>, vector<4x128xf32>, vector<128x128xf32> -> vector<128x128xf32>
    %42 = arith.mulf %41, %10 : vector<128x128xf32>
    %cst_36 = arith.constant dense<0.000000e+00> : vector<128xf32>
    %43 = vector.multi_reduction <add>, %42, %cst_36 [0] : vector<128x128xf32> to vector<128xf32>
    %44 = vector.shape_cast %43 : vector<128xf32> to vector<1x128xf32>
    %45 = vector.broadcast %44 : vector<1x128xf32> to vector<128x128xf32>
    %46 = arith.mulf %45, %15 : vector<128x128xf32>
    %47 = arith.mulf %46, %20 : vector<128x128xf32>
    %c0_37 = arith.constant 0 : index
    %c0_38 = arith.constant 0 : index
    %48 = vector.load %arg12[%c0_37, %c0_38] : memref<128x128xf32, #tpu.memory_space<vmem>>, vector<128x128xf32>
    %cst_39 = arith.constant dense<0.000000e+00> : vector<128x128xf32>
    %49 = tpu.matmul %47, %48, %cst_39 {dimension_numbers = #tpu.dot_dimension_numbers<[1], [0], [0], [1], [0, 0, 1, 1], [], []>} : vector<128x128xf32>, vector<128x128xf32>, vector<128x128xf32> -> vector<128x128xf32>
    %c0_40 = arith.constant 0 : index
    %c0_41 = arith.constant 0 : index
    %50 = vector.load %arg13[%c0_40, %c0_41] : memref<1x128xf32, #tpu.memory_space<vmem>>, vector<1x128xf32>
    %51 = vector.broadcast %50 : vector<1x128xf32> to vector<128x128xf32>
    %52 = arith.addf %49, %51 : vector<128x128xf32>
    %c0_42 = arith.constant 0 : index
    %c0_43 = arith.constant 0 : index
    %c0_44 = arith.constant 0 : index
    %53 = vector.load %arg15[%c0_42, %c0_43, %c0_44] : memref<1x128x128xf32, #tpu.memory_space<vmem>>, vector<1x128x128xf32>
    %54 = vector.shape_cast %53 : vector<1x128x128xf32> to vector<128x128xf32>
    %55 = vector.shape_cast %52 : vector<128x128xf32> to vector<1x128x128xf32>
    tpu.vector_store %arg15[%c0_42, %c0_43, %c0_44], %55 {strides = array<i32>} : memref<1x128x128xf32, #tpu.memory_space<vmem>>, vector<1x128x128xf32>,
    return
  }
  func.func @transform_0(%arg0: i32) -> (i32, i32, i32) {
    %c0_i32 = arith.constant 0 : i32
    %c0_i32_0 = arith.constant 0 : i32
    %c0_i32_1 = arith.constant 0 : i32
    return %arg0, %c0_i32, %c0_i32_0 : i32, i32, i32
  }
  func.func @transform_1(%arg0: i32) -> (i32, i32, i32) {
    %c0_i32 = arith.constant 0 : i32
    %c0_i32_0 = arith.constant 0 : i32
    %c0_i32_1 = arith.constant 0 : i32
    return %arg0, %c0_i32, %c0_i32_0 : i32, i32, i32
  }
  func.func @transform_2(%arg0: i32) -> (i32, i32, i32) {
    %c0_i32 = arith.constant 0 : i32
    %c0_i32_0 = arith.constant 0 : i32
    %c0_i32_1 = arith.constant 0 : i32
    return %arg0, %c0_i32, %c0_i32_0 : i32, i32, i32
  }
  func.func @transform_3(%arg0: i32) -> (i32, i32) {
    %c0_i32 = arith.constant 0 : i32
    %c0_i32_0 = arith.constant 0 : i32
    %c0_i32_1 = arith.constant 0 : i32
    return %c0_i32, %c0_i32_0 : i32, i32
  }
  func.func @transform_4(%arg0: i32) -> (i32, i32) {
    %c0_i32 = arith.constant 0 : i32
    %c0_i32_0 = arith.constant 0 : i32
    %c0_i32_1 = arith.constant 0 : i32
    return %c0_i32, %c0_i32_0 : i32, i32
  }
  func.func @transform_5(%arg0: i32) -> (i32, i32) {
    %c0_i32 = arith.constant 0 : i32
    %c0_i32_0 = arith.constant 0 : i32
    %c0_i32_1 = arith.constant 0 : i32
    return %c0_i32, %c0_i32_0 : i32, i32
  }
  func.func @transform_6(%arg0: i32) -> (i32, i32) {
    %c0_i32 = arith.constant 0 : i32
    %c0_i32_0 = arith.constant 0 : i32
    %c0_i32_1 = arith.constant 0 : i32
    return %c0_i32, %c0_i32_0 : i32, i32
  }
  func.func @transform_7(%arg0: i32) -> (i32, i32) {
    %c0_i32 = arith.constant 0 : i32
    %c0_i32_0 = arith.constant 0 : i32
    %c0_i32_1 = arith.constant 0 : i32
    return %c0_i32, %c0_i32_0 : i32, i32
  }
  func.func @transform_8(%arg0: i32) -> (i32, i32) {
    %c0_i32 = arith.constant 0 : i32
    %c0_i32_0 = arith.constant 0 : i32
    %c0_i32_1 = arith.constant 0 : i32
    return %c0_i32, %c0_i32_0 : i32, i32
  }
  func.func @transform_9(%arg0: i32) -> (i32, i32) {
    %c0_i32 = arith.constant 0 : i32
    %c0_i32_0 = arith.constant 0 : i32
    %c0_i32_1 = arith.constant 0 : i32
    return %c0_i32, %c0_i32_0 : i32, i32
  }
  func.func @transform_10(%arg0: i32) -> (i32, i32) {
    %c0_i32 = arith.constant 0 : i32
    %c0_i32_0 = arith.constant 0 : i32
    %c0_i32_1 = arith.constant 0 : i32
    return %c0_i32, %c0_i32_0 : i32, i32
  }
  func.func @transform_11(%arg0: i32) -> (i32, i32) {
    %c0_i32 = arith.constant 0 : i32
    %c0_i32_0 = arith.constant 0 : i32
    %c0_i32_1 = arith.constant 0 : i32
    return %c0_i32, %c0_i32_0 : i32, i32
  }
  func.func @transform_12(%arg0: i32) -> (i32, i32) {
    %c0_i32 = arith.constant 0 : i32
    %c0_i32_0 = arith.constant 0 : i32
    %c0_i32_1 = arith.constant 0 : i32
    return %c0_i32, %c0_i32_0 : i32, i32
  }
  func.func @transform_13(%arg0: i32) -> (i32, i32) {
    %c0_i32 = arith.constant 0 : i32
    %c0_i32_0 = arith.constant 0 : i32
    %c0_i32_1 = arith.constant 0 : i32
    return %c0_i32, %c0_i32_0 : i32, i32
  }
  func.func @transform_14(%arg0: i32) -> (i32, i32, i32) {
    %c0_i32 = arith.constant 0 : i32
    %c0_i32_0 = arith.constant 0 : i32
    %c0_i32_1 = arith.constant 0 : i32
    return %arg0, %c0_i32, %c0_i32_0 : i32, i32, i32
  }
  func.func @transform_15(%arg0: i32) -> (i32, i32, i32) {
    %c0_i32 = arith.constant 0 : i32
    %c0_i32_0 = arith.constant 0 : i32
    %c0_i32_1 = arith.constant 0 : i32
    return %arg0, %c0_i32, %c0_i32_0 : i32, i32, i32
  }
}

</mosaic_0001>

<llo_original>
// kernel: tpu_custom_call.1
$region0: #{tpu_custom_call.1}
  #allocation0 [shape = 'u32[]', space=smem, size = 0x4, offset = 0x4, fixed_abs, tag = 'smem constant byte address 0x4 - core index']
  #allocation1 [shape = 'u32[72,128]{1,0:T(1,128)}', space=vmem, size = 0x9000, scoped, tag = 'internal scratch']
  %s0 = inlined_call_operand.hbm [shape: f32[2,128,128], index: 0, kind: input, shape index: {}]
  %s1 = inlined_call_operand.hbm [shape: f32[2,128,128], index: 1, kind: input, shape index: {}]
  %s2 = inlined_call_operand.hbm [shape: f32[2,128,128], index: 2, kind: input, shape index: {}]
  %s3 = inlined_call_operand.vmem [shape: f32[128,128], index: 3, kind: input, shape index: {}]
  %s4 = inlined_call_operand.vmem [shape: f32[1,128], index: 4, kind: input, shape index: {}]
  %s5 = inlined_call_operand.hbm [shape: f32[128,128], index: 5, kind: input, shape index: {}]
  %s6 = inlined_call_operand.vmem [shape: f32[1,128], index: 6, kind: input, shape index: {}]
  %s7 = inlined_call_operand.hbm [shape: f32[128,128], index: 7, kind: input, shape index: {}]
  %s8 = inlined_call_operand.vmem [shape: f32[1,128], index: 8, kind: input, shape index: {}]
  %s9 = inlined_call_operand.vmem [shape: f32[128,4], index: 9, kind: input, shape index: {}]
  %s10 = inlined_call_operand.vmem [shape: f32[1,4], index: 10, kind: input, shape index: {}]
  %s11 = inlined_call_operand.hbm [shape: f32[128,128], index: 11, kind: input, shape index: {}]
  %s12 = inlined_call_operand.vmem [shape: f32[1,128], index: 12, kind: input, shape index: {}]
  %s13 = inlined_call_operand.vmem [shape: f32[4,128], index: 13, kind: input, shape index: {}]
  %s14 = inlined_call_operand.hbm [shape: f32[2,128,128], index: 14, kind: output, shape index: {0}]
  %s15 = inlined_call_operand.vmem [shape: f32[2,128,4], index: 15, kind: output, shape index: {1}]
  %16 = xla_tuple %s14, %s15
  %s17 = sld [smem:[#allocation0]]
  $region121: #{tpu_custom_call.1} parent=0
    _
  %s19 = ssub.s32 1, %s17
  %s20 = scalar_select 0, %s19, %s17
  $region1: #{tpu_custom_call.1} parent=0
    #allocation2 [shape = 'u8[131072]{0}', space=vmem, size = 0x20000, scoped, tag = 'input window, operand 0']
    #allocation3 [shape = 's32[2]{0}', space=sflag, size = 0x8, scoped, tag = 'scoped memory for tpu_custom_call.1']
    #allocation4 [shape = 's32[2]{0}', space=sflag, size = 0x8, scoped, tag = 'scoped memory for tpu_custom_call.1']
    #allocation5 [shape = 'u8[131072]{0}', space=vmem, size = 0x20000, scoped, tag = 'input window, operand 1']
    #allocation6 [shape = 's32[2]{0}', space=sflag, size = 0x8, scoped, tag = 'scoped memory for tpu_custom_call.1']
    #allocation7 [shape = 'u8[131072]{0}', space=vmem, size = 0x20000, scoped, tag = 'input window, operand 2']
    #allocation8 [shape = 'u8[65536]{0}', space=vmem, size = 0x10000, scoped, tag = 'input window, operand 5, single buffered']
    #allocation9 [shape = 's32[1]{0}', space=sflag, size = 0x4, scoped, tag = 'scoped memory for tpu_custom_call.1']
    #allocation10 [shape = 'u8[65536]{0}', space=vmem, size = 0x10000, scoped, tag = 'input window, operand 7, single buffered']
    #allocation11 [shape = 'u8[65536]{0}', space=vmem, size = 0x10000, scoped, tag = 'input window, operand 11, single buffered']
    #allocation12 [shape = 's32[1]{0}', space=sflag, size = 0x4, scoped, tag = 'scoped memory for tpu_custom_call.1']
    #allocation13 [shape = 'u8[131072]{0}', space=vmem, size = 0x20000, scoped, tag = 'output window, operand 0']
    %21 = vsyncpa [#allocation3], 0
    %s22 = scalar_lea.sflag [#allocation3], 1
    %23 = vsyncpa %s22, 0
    %24 = vsyncpa [#allocation6], 0
    %s25 = scalar_lea.sflag [#allocation6], 1
    %26 = vsyncpa %s25, 0
    %27 = vsyncpa [#allocation9], 0
    %28 = vsyncpa [#allocation12], 0
    %29 = vsyncpa [#allocation4], 0
    %s30 = scalar_lea.sflag [#allocation4], 1
    %31 = vsyncpa %s30, 0
    loop: start=0, step=1, limit=4
    $region2: #{tpu_custom_call.1} parent=1 // loop_pre_header
      _
    $region3: #{tpu_custom_call.1} parent=1 // loop_header
      %s33 = sphi 0, %s37
      %p34 = scmp.ge.s32.totalorder %s33, 4
      %s43 = sphi 0, %s45
      %s46 = sphi 0, %s43
      %s47 = sphi 0, %s46
      %s63 = sphi 0, %s47
      %s69 = sphi 0, %s71
      %s72 = sphi 0, %s69
      %s73 = sphi 0, %s72
      %s89 = sphi 0, %s73
      %s95 = sphi 0, %s97
      %s98 = sphi 0, %s95
      %s99 = sphi 0, %s98
      %s115 = sphi 0, %s99
      %s119 = sphi 0, %s119
      %s121 = sphi 0, %s119
      %s122 = sphi 0, %s121
      %s136 = sphi 0, %s122
      %s140 = sphi 0, %s140
      %s142 = sphi 0, %s140
      %s143 = sphi 0, %s142
      %s157 = sphi 0, %s143
      %s161 = sphi 0, %s161
      %s163 = sphi 0, %s161
      %s164 = sphi 0, %s163
      %s178 = sphi 0, %s164
      %s182 = sphi 0, %s182
      %s184 = sphi 0, %s182
      %s185 = sphi 0, %s184
      %s199 = sphi 0, %s185
      %s203 = sphi 0, %s203
      %s205 = sphi 0, %s203
      %s206 = sphi 0, %s205
      %s220 = sphi 0, %s206
      %s224 = sphi 0, %s224
      %s226 = sphi 0, %s224
      %s227 = sphi 0, %s226
      %s241 = sphi 0, %s227
      %s245 = sphi 0, %s245
      %s247 = sphi 0, %s245
      %s248 = sphi 0, %s247
      %s262 = sphi 0, %s248
      %s266 = sphi 0, %s266
      %s268 = sphi 0, %s266
      %s269 = sphi 0, %s268
      %s283 = sphi 0, %s269
      %s287 = sphi 0, %s287
      %s289 = sphi 0, %s287
      %s290 = sphi 0, %s289
      %s304 = sphi 0, %s290
      %s308 = sphi 0, %s308
      %s310 = sphi 0, %s308
      %s311 = sphi 0, %s310
      %s325 = sphi 0, %s311
      %s329 = sphi 0, %s329
      %s331 = sphi 0, %s329
      %s332 = sphi 0, %s331
      %s346 = sphi 0, %s332
      %s352 = sphi 0, %s354
      %s355 = sphi 0, %s352
      %s356 = sphi 0, %s355
      %s372 = sphi 0, %s356
      %s378 = sphi 0, %s380
      %s381 = sphi 0, %s378
      %s382 = sphi 0, %s381
      %s398 = sphi 0, %s382
    $region4: #{tpu_custom_call.1} parent=1 // loop_header_branch
      %36 = sbr.rel (%p34) target = $region8
    $region5: #{tpu_custom_call.1} parent=1 // loop_body
      %s38 = ssub.s32 %s33, 1
      %s39 = ssub.s32 %s33, 2
      %s40 = sadd.s32 %s33, 1
      %s41 = ssub.s32 %s33, %s40
      %p42 = scmp.eq.s32.totalorder %s41, 0
      %s44 = sadd.s32 %s43, 1
      %s45 = scalar_select %p42, %s43, %s44
      %p48 = pneg %p42
      %p49 = scmp.eq.s32.totalorder %s33, 1
      %p50 = por %p48, %p49
      %p51 = scmp.ne.s32.totalorder %s43, %s46
      %p52 = scmp.eq.s32.totalorder %s33, 0
      %p53 = por %p51, %p52
      %p54 = scmp.ne.s32.totalorder %s43, %s46
      %p55 = scmp.eq.s32.totalorder %s38, 1
      %p56 = por %p54, %p55
      %p57 = scmp.ne.s32.totalorder %s46, %s47
      %p58 = scmp.eq.s32.totalorder %s38, 0
      %p59 = por %p57, %p58
      %p60 = scmp.ne.s32.totalorder %s46, %s47
      %p61 = scmp.eq.s32.totalorder %s39, 1
      %p62 = por %p60, %p61
      %p64 = scmp.ne.s32.totalorder %s47, %s63
      %p65 = scmp.eq.s32.totalorder %s39, 0
      %p66 = por %p64, %p65
      %s67 = ssub.s32 %s33, %s40
      %p68 = scmp.eq.s32.totalorder %s67, 0
      %s70 = sadd.s32 %s69, 1
      %s71 = scalar_select %p68, %s69, %s70
      %p74 = pneg %p68
      %p75 = scmp.eq.s32.totalorder %s33, 1
      %p76 = por %p74, %p75
      %p77 = scmp.ne.s32.totalorder %s69, %s72
      %p78 = scmp.eq.s32.totalorder %s33, 0
      %p79 = por %p77, %p78
      %p80 = scmp.ne.s32.totalorder %s69, %s72
      %p81 = scmp.eq.s32.totalorder %s38, 1
      %p82 = por %p80, %p81
      %p83 = scmp.ne.s32.totalorder %s72, %s73
      %p84 = scmp.eq.s32.totalorder %s38, 0
      %p85 = por %p83, %p84
      %p86 = scmp.ne.s32.totalorder %s72, %s73
      %p87 = scmp.eq.s32.totalorder %s39, 1
      %p88 = por %p86, %p87
      %p90 = scmp.ne.s32.totalorder %s73, %s89
      %p91 = scmp.eq.s32.totalorder %s39, 0
      %p92 = por %p90, %p91
      %s93 = ssub.s32 %s33, %s40
      %p94 = scmp.eq.s32.totalorder %s93, 0
      %s96 = sadd.s32 %s95, 1
      %s97 = scalar_select %p94, %s95, %s96
      %p100 = pneg %p94
      %p101 = scmp.eq.s32.totalorder %s33, 1
      %p102 = por %p100, %p101
      %p103 = scmp.ne.s32.totalorder %s95, %s98
      %p104 = scmp.eq.s32.totalorder %s33, 0
      %p105 = por %p103, %p104
      %p106 = scmp.ne.s32.totalorder %s95, %s98
      %p107 = scmp.eq.s32.totalorder %s38, 1
      %p108 = por %p106, %p107
      %p109 = scmp.ne.s32.totalorder %s98, %s99
      %p110 = scmp.eq.s32.totalorder %s38, 0
      %p111 = por %p109, %p110
      %p112 = scmp.ne.s32.totalorder %s98, %s99
      %p113 = scmp.eq.s32.totalorder %s39, 1
      %p114 = por %p112, %p113
      %p116 = scmp.ne.s32.totalorder %s99, %s115
      %p117 = scmp.eq.s32.totalorder %s39, 0
      %p118 = por %p116, %p117
      %s120 = sadd.s32 %s119, 1
      %p123 = scmp.eq.s32.totalorder %s33, 1
      %p124 = scmp.ne.s32.totalorder %s119, %s121
      %p125 = scmp.eq.s32.totalorder %s33, 0
      %p126 = por %p124, %p125
      %p127 = scmp.ne.s32.totalorder %s119, %s121
      %p128 = scmp.eq.s32.totalorder %s38, 1
      %p129 = por %p127, %p128
      %p130 = scmp.ne.s32.totalorder %s121, %s122
      %p131 = scmp.eq.s32.totalorder %s38, 0
      %p132 = por %p130, %p131
      %p133 = scmp.ne.s32.totalorder %s121, %s122
      %p134 = scmp.eq.s32.totalorder %s39, 1
      %p135 = por %p133, %p134
      %p137 = scmp.ne.s32.totalorder %s122, %s136
      %p138 = scmp.eq.s32.totalorder %s39, 0
      %p139 = por %p137, %p138
      %s141 = sadd.s32 %s140, 1
      %p144 = scmp.eq.s32.totalorder %s33, 1
      %p145 = scmp.ne.s32.totalorder %s140, %s142
      %p146 = scmp.eq.s32.totalorder %s33, 0
      %p147 = por %p145, %p146
      %p148 = scmp.ne.s32.totalorder %s140, %s142
      %p149 = scmp.eq.s32.totalorder %s38, 1
      %p150 = por %p148, %p149
      %p151 = scmp.ne.s32.totalorder %s142, %s143
      %p152 = scmp.eq.s32.totalorder %s38, 0
      %p153 = por %p151, %p152
      %p154 = scmp.ne.s32.totalorder %s142, %s143
      %p155 = scmp.eq.s32.totalorder %s39, 1
      %p156 = por %p154, %p155
      %p158 = scmp.ne.s32.totalorder %s143, %s157
      %p159 = scmp.eq.s32.totalorder %s39, 0
      %p160 = por %p158, %p159
      %s162 = sadd.s32 %s161, 1
      %p165 = scmp.eq.s32.totalorder %s33, 1
      %p166 = scmp.ne.s32.totalorder %s161, %s163
      %p167 = scmp.eq.s32.totalorder %s33, 0
      %p168 = por %p166, %p167
      %p169 = scmp.ne.s32.totalorder %s161, %s163
      %p170 = scmp.eq.s32.totalorder %s38, 1
      %p171 = por %p169, %p170
      %p172 = scmp.ne.s32.totalorder %s163, %s164
      %p173 = scmp.eq.s32.totalorder %s38, 0
      %p174 = por %p172, %p173
      %p175 = scmp.ne.s32.totalorder %s163, %s164
      %p176 = scmp.eq.s32.totalorder %s39, 1
      %p177 = por %p175, %p176
      %p179 = scmp.ne.s32.totalorder %s164, %s178
      %p180 = scmp.eq.s32.totalorder %s39, 0
      %p181 = por %p179, %p180
      %s183 = sadd.s32 %s182, 1
      %p186 = scmp.eq.s32.totalorder %s33, 1
      %p187 = scmp.ne.s32.totalorder %s182, %s184
      %p188 = scmp.eq.s32.totalorder %s33, 0
      %p189 = por %p187, %p188
      %p190 = scmp.ne.s32.totalorder %s182, %s184
      %p191 = scmp.eq.s32.totalorder %s38, 1
      %p192 = por %p190, %p191
      %p193 = scmp.ne.s32.totalorder %s184, %s185
      %p194 = scmp.eq.s32.totalorder %s38, 0
      %p195 = por %p193, %p194
      %p196 = scmp.ne.s32.totalorder %s184, %s185
      %p197 = scmp.eq.s32.totalorder %s39, 1
      %p198 = por %p196, %p197
      %p200 = scmp.ne.s32.totalorder %s185, %s199
      %p201 = scmp.eq.s32.totalorder %s39, 0
      %p202 = por %p200, %p201
      %s204 = sadd.s32 %s203, 1
      %p207 = scmp.eq.s32.totalorder %s33, 1
      %p208 = scmp.ne.s32.totalorder %s203, %s205
      %p209 = scmp.eq.s32.totalorder %s33, 0
      %p210 = por %p208, %p209
      %p211 = scmp.ne.s32.totalorder %s203, %s205
      %p212 = scmp.eq.s32.totalorder %s38, 1
      %p213 = por %p211, %p212
      %p214 = scmp.ne.s32.totalorder %s205, %s206
      %p215 = scmp.eq.s32.totalorder %s38, 0
      %p216 = por %p214, %p215
      %p217 = scmp.ne.s32.totalorder %s205, %s206
      %p218 = scmp.eq.s32.totalorder %s39, 1
      %p219 = por %p217, %p218
      %p221 = scmp.ne.s32.totalorder %s206, %s220
      %p222 = scmp.eq.s32.totalorder %s39, 0
      %p223 = por %p221, %p222
      %s225 = sadd.s32 %s224, 1
      %p228 = scmp.eq.s32.totalorder %s33, 1
      %p229 = scmp.ne.s32.totalorder %s224, %s226
      %p230 = scmp.eq.s32.totalorder %s33, 0
      %p231 = por %p229, %p230
      %p232 = scmp.ne.s32.totalorder %s224, %s226
      %p233 = scmp.eq.s32.totalorder %s38, 1
      %p234 = por %p232, %p233
      %p235 = scmp.ne.s32.totalorder %s226, %s227
      %p236 = scmp.eq.s32.totalorder %s38, 0
      %p237 = por %p235, %p236
      %p238 = scmp.ne.s32.totalorder %s226, %s227
      %p239 = scmp.eq.s32.totalorder %s39, 1
      %p240 = por %p238, %p239
      %p242 = scmp.ne.s32.totalorder %s227, %s241
      %p243 = scmp.eq.s32.totalorder %s39, 0
      %p244 = por %p242, %p243
      %s246 = sadd.s32 %s245, 1
      %p249 = scmp.eq.s32.totalorder %s33, 1
      %p250 = scmp.ne.s32.totalorder %s245, %s247
      %p251 = scmp.eq.s32.totalorder %s33, 0
      %p252 = por %p250, %p251
      %p253 = scmp.ne.s32.totalorder %s245, %s247
      %p254 = scmp.eq.s32.totalorder %s38, 1
      %p255 = por %p253, %p254
      %p256 = scmp.ne.s32.totalorder %s247, %s248
      %p257 = scmp.eq.s32.totalorder %s38, 0
      %p258 = por %p256, %p257
      %p259 = scmp.ne.s32.totalorder %s247, %s248
      %p260 = scmp.eq.s32.totalorder %s39, 1
      %p261 = por %p259, %p260
      %p263 = scmp.ne.s32.totalorder %s248, %s262
      %p264 = scmp.eq.s32.totalorder %s39, 0
      %p265 = por %p263, %p264
      %s267 = sadd.s32 %s266, 1
      %p270 = scmp.eq.s32.totalorder %s33, 1
      %p271 = scmp.ne.s32.totalorder %s266, %s268
      %p272 = scmp.eq.s32.totalorder %s33, 0
      %p273 = por %p271, %p272
      %p274 = scmp.ne.s32.totalorder %s266, %s268
      %p275 = scmp.eq.s32.totalorder %s38, 1
      %p276 = por %p274, %p275
      %p277 = scmp.ne.s32.totalorder %s268, %s269
      %p278 = scmp.eq.s32.totalorder %s38, 0
      %p279 = por %p277, %p278
      %p280 = scmp.ne.s32.totalorder %s268, %s269
      %p281 = scmp.eq.s32.totalorder %s39, 1
      %p282 = por %p280, %p281
      %p284 = scmp.ne.s32.totalorder %s269, %s283
      %p285 = scmp.eq.s32.totalorder %s39, 0
      %p286 = por %p284, %p285
      %s288 = sadd.s32 %s287, 1
      %p291 = scmp.eq.s32.totalorder %s33, 1
      %p292 = scmp.ne.s32.totalorder %s287, %s289
      %p293 = scmp.eq.s32.totalorder %s33, 0
      %p294 = por %p292, %p293
      %p295 = scmp.ne.s32.totalorder %s287, %s289
      %p296 = scmp.eq.s32.totalorder %s38, 1
      %p297 = por %p295, %p296
      %p298 = scmp.ne.s32.totalorder %s289, %s290
      %p299 = scmp.eq.s32.totalorder %s38, 0
      %p300 = por %p298, %p299
      %p301 = scmp.ne.s32.totalorder %s289, %s290
      %p302 = scmp.eq.s32.totalorder %s39, 1
      %p303 = por %p301, %p302
      %p305 = scmp.ne.s32.totalorder %s290, %s304
      %p306 = scmp.eq.s32.totalorder %s39, 0
      %p307 = por %p305, %p306
      %s309 = sadd.s32 %s308, 1
      %p312 = scmp.eq.s32.totalorder %s33, 1
      %p313 = scmp.ne.s32.totalorder %s308, %s310
      %p314 = scmp.eq.s32.totalorder %s33, 0
      %p315 = por %p313, %p314
      %p316 = scmp.ne.s32.totalorder %s308, %s310
      %p317 = scmp.eq.s32.totalorder %s38, 1
      %p318 = por %p316, %p317
      %p319 = scmp.ne.s32.totalorder %s310, %s311
      %p320 = scmp.eq.s32.totalorder %s38, 0
      %p321 = por %p319, %p320
      %p322 = scmp.ne.s32.totalorder %s310, %s311
      %p323 = scmp.eq.s32.totalorder %s39, 1
      %p324 = por %p322, %p323
      %p326 = scmp.ne.s32.totalorder %s311, %s325
      %p327 = scmp.eq.s32.totalorder %s39, 0
      %p328 = por %p326, %p327
      %s330 = sadd.s32 %s329, 1
      %p333 = scmp.eq.s32.totalorder %s33, 1
      %p334 = scmp.ne.s32.totalorder %s329, %s331
      %p335 = scmp.eq.s32.totalorder %s33, 0
      %p336 = por %p334, %p335
      %p337 = scmp.ne.s32.totalorder %s329, %s331
      %p338 = scmp.eq.s32.totalorder %s38, 1
      %p339 = por %p337, %p338
      %p340 = scmp.ne.s32.totalorder %s331, %s332
      %p341 = scmp.eq.s32.totalorder %s38, 0
      %p342 = por %p340, %p341
      %p343 = scmp.ne.s32.totalorder %s331, %s332
      %p344 = scmp.eq.s32.totalorder %s39, 1
      %p345 = por %p343, %p344
      %p347 = scmp.ne.s32.totalorder %s332, %s346
      %p348 = scmp.eq.s32.totalorder %s39, 0
      %p349 = por %p347, %p348
      %s350 = ssub.s32 %s33, %s40
      %p351 = scmp.eq.s32.totalorder %s350, 0
      %s353 = sadd.s32 %s352, 1
      %s354 = scalar_select %p351, %s352, %s353
      %p357 = pneg %p351
      %p358 = scmp.eq.s32.totalorder %s33, 1
      %p359 = por %p357, %p358
      %p360 = scmp.ne.s32.totalorder %s352, %s355
      %p361 = scmp.eq.s32.totalorder %s33, 0
      %p362 = por %p360, %p361
      %p363 = scmp.ne.s32.totalorder %s352, %s355
      %p364 = scmp.eq.s32.totalorder %s38, 1
      %p365 = por %p363, %p364
      %p366 = scmp.ne.s32.totalorder %s355, %s356
      %p367 = scmp.eq.s32.totalorder %s38, 0
      %p368 = por %p366, %p367
      %p369 = scmp.ne.s32.totalorder %s355, %s356
      %p370 = scmp.eq.s32.totalorder %s39, 1
      %p371 = por %p369, %p370
      %p373 = scmp.ne.s32.totalorder %s356, %s372
      %p374 = scmp.eq.s32.totalorder %s39, 0
      %p375 = por %p373, %p374
      %s376 = ssub.s32 %s33, %s40
      %p377 = scmp.eq.s32.totalorder %s376, 0
      %s379 = sadd.s32 %s378, 1
      %s380 = scalar_select %p377, %s378, %s379
      %p383 = pneg %p377
      %p384 = scmp.eq.s32.totalorder %s33, 1
      %p385 = por %p383, %p384
      %p386 = scmp.ne.s32.totalorder %s378, %s381
      %p387 = scmp.eq.s32.totalorder %s33, 0
      %p388 = por %p386, %p387
      %p389 = scmp.ne.s32.totalorder %s378, %s381
      %p390 = scmp.eq.s32.totalorder %s38, 1
      %p391 = por %p389, %p390
      %p392 = scmp.ne.s32.totalorder %s381, %s382
      %p393 = scmp.eq.s32.totalorder %s38, 0
      %p394 = por %p392, %p393
      %p395 = scmp.ne.s32.totalorder %s381, %s382
      %p396 = scmp.eq.s32.totalorder %s39, 1
      %p397 = por %p395, %p396
      %p399 = scmp.ne.s32.totalorder %s382, %s398
      %p400 = scmp.eq.s32.totalorder %s39, 0
      %p401 = por %p399, %p400
      %p402 = scmp.le.s32.totalorder 1, %s33
      %p403 = scmp.lt.s32.totalorder %s33, 3
      %p404 = pnand %p402, %p403
      %p405 = pneg %p404
      // Predicated region
      $region9: #{tpu_custom_call.1} parent=5 // pred_check
        _
      $region10: #{tpu_custom_call.1} parent=5 // pred_check_branch
        %407 = sbr.rel (%p404) target = $region12
      $region11: #{tpu_custom_call.1} parent=5 // pred_region
        %s408 = ssub.s32 %s33, 1
        // Predicated region
        $region13: #{tpu_custom_call.1} parent=11 // pred_check
          %p409 = pneg %p132
        $region14: #{tpu_custom_call.1} parent=11 // pred_check_branch
          %411 = sbr.rel (%p409) target = $region16
        $region15: #{tpu_custom_call.1} parent=11 // pred_region
          _
        $region16: #{tpu_custom_call.1} parent=11 // pred_fallthru
          _
        // Predicated region
        $region17: #{tpu_custom_call.1} parent=11 // pred_check
          %p412 = pneg %p153
        $region18: #{tpu_custom_call.1} parent=11 // pred_check_branch
          %414 = sbr.rel (%p412) target = $region20
        $region19: #{tpu_custom_call.1} parent=11 // pred_region
          _
        $region20: #{tpu_custom_call.1} parent=11 // pred_fallthru
          _
        // Predicated region
        $region21: #{tpu_custom_call.1} parent=11 // pred_check
          %p415 = pneg %p174
        $region22: #{tpu_custom_call.1} parent=11 // pred_check_branch
          %417 = sbr.rel (%p415) target = $region24
        $region23: #{tpu_custom_call.1} parent=11 // pred_region
          %419 = vsyncadd [#allocation9], 0
          %s420 = sshll.u32 %s5, 4
          %s421 = int_to_ptr.hbm [resolvable:$true] %s420
          %s422 = sshll.u32 [#allocation8], 4
          %s423 = int_to_ptr.vmem [resolvable:$true] %s422
          %428 = dma.hbm_to_vmem [thread:$0]  %s421, 2048, %s423, [#allocation9], 128, 128, 8
        $region24: #{tpu_custom_call.1} parent=11 // pred_fallthru
          _
        // Predicated region
        $region25: #{tpu_custom_call.1} parent=11 // pred_check
          %p429 = pneg %p195
        $region26: #{tpu_custom_call.1} parent=11 // pred_check_branch
          %431 = sbr.rel (%p429) target = $region28
        $region27: #{tpu_custom_call.1} parent=11 // pred_region
          _
        $region28: #{tpu_custom_call.1} parent=11 // pred_fallthru
          _
        // Predicated region
        $region29: #{tpu_custom_call.1} parent=11 // pred_check
          %p432 = pneg %p216
        $region30: #{tpu_custom_call.1} parent=11 // pred_check_branch
          %434 = sbr.rel (%p432) target = $region32
        $region31: #{tpu_custom_call.1} parent=11 // pred_region
          %436 = vsyncadd [#allocation9], 0
          %s437 = sshll.u32 %s7, 4
          %s438 = int_to_ptr.hbm [resolvable:$true] %s437
          %s439 = sshll.u32 [#allocation10], 4
          %s440 = int_to_ptr.vmem [resolvable:$true] %s439
          %445 = dma.hbm_to_vmem [thread:$0]  %s438, 2048, %s440, [#allocation9], 128, 128, 8
        $region32: #{tpu_custom_call.1} parent=11 // pred_fallthru
          _
        // Predicated region
        $region33: #{tpu_custom_call.1} parent=11 // pred_check
          %p446 = pneg %p237
        $region34: #{tpu_custom_call.1} parent=11 // pred_check_branch
          %448 = sbr.rel (%p446) target = $region36
        $region35: #{tpu_custom_call.1} parent=11 // pred_region
          _
        $region36: #{tpu_custom_call.1} parent=11 // pred_fallthru
          _
        // Predicated region
        $region37: #{tpu_custom_call.1} parent=11 // pred_check
          %p449 = pneg %p258
        $region38: #{tpu_custom_call.1} parent=11 // pred_check_branch
          %451 = sbr.rel (%p449) target = $region40
        $region39: #{tpu_custom_call.1} parent=11 // pred_region
          _
        $region40: #{tpu_custom_call.1} parent=11 // pred_fallthru
          _
        // Predicated region
        $region41: #{tpu_custom_call.1} parent=11 // pred_check
          %p452 = pneg %p279
        $region42: #{tpu_custom_call.1} parent=11 // pred_check_branch
          %454 = sbr.rel (%p452) target = $region44
        $region43: #{tpu_custom_call.1} parent=11 // pred_region
          _
        $region44: #{tpu_custom_call.1} parent=11 // pred_fallthru
          _
        // Predicated region
        $region45: #{tpu_custom_call.1} parent=11 // pred_check
          %p455 = pneg %p300
        $region46: #{tpu_custom_call.1} parent=11 // pred_check_branch
          %457 = sbr.rel (%p455) target = $region48
        $region47: #{tpu_custom_call.1} parent=11 // pred_region
          %459 = vsyncadd [#allocation12], 0
          %s460 = sshll.u32 %s11, 4
          %s461 = int_to_ptr.hbm [resolvable:$true] %s460
          %s462 = sshll.u32 [#allocation11], 4
          %s463 = int_to_ptr.vmem [resolvable:$true] %s462
          %468 = dma.hbm_to_vmem [thread:$0]  %s461, 2048, %s463, [#allocation12], 128, 128, 8
        $region48: #{tpu_custom_call.1} parent=11 // pred_fallthru
          _
        // Predicated region
        $region49: #{tpu_custom_call.1} parent=11 // pred_check
          %p469 = pneg %p321
        $region50: #{tpu_custom_call.1} parent=11 // pred_check_branch
          %471 = sbr.rel (%p469) target = $region52
        $region51: #{tpu_custom_call.1} parent=11 // pred_region
          _
        $region52: #{tpu_custom_call.1} parent=11 // pred_fallthru
          _
        // Predicated region
        $region53: #{tpu_custom_call.1} parent=11 // pred_check
          %p472 = pneg %p342
        $region54: #{tpu_custom_call.1} parent=11 // pred_check_branch
          %474 = sbr.rel (%p472) target = $region56
        $region55: #{tpu_custom_call.1} parent=11 // pred_region
          _
        $region56: #{tpu_custom_call.1} parent=11 // pred_fallthru
          _
      $region12: #{tpu_custom_call.1} parent=5 // pred_fallthru
        _
      %p475 = scmp.lt.s32.totalorder %s33, 2
      // Predicated region
      $region57: #{tpu_custom_call.1} parent=5 // pred_check
        %p476 = pneg %p475
      $region58: #{tpu_custom_call.1} parent=5 // pred_check_branch
        %478 = sbr.rel (%p476) target = $region60
      $region59: #{tpu_custom_call.1} parent=5 // pred_region
        // Predicated region
        $region61: #{tpu_custom_call.1} parent=59 // pred_check
          %p479 = pneg %p53
        $region62: #{tpu_custom_call.1} parent=59 // pred_check_branch
          %481 = sbr.rel (%p479) target = $region64
        $region63: #{tpu_custom_call.1} parent=59 // pred_region
          %s482 = sand.u32 %s43, 1
          %s483 = scalar_lea.sflag [#allocation3], %s482
          %s484 = sand.u32 %s43, 1
          %s485 = smul.addr %s484, 128
          %s486 = scalar_lea.vmem [#allocation2], %s485
          %488 = vsyncadd %s483, 0
          %s489 = smul.addr %s33, 16
          %s490 = smul.addr %s489, 8
          %s491 = scalar_lea.hbm %s0, %s490
          %s492 = sshll.u32 %s491, 4
          %s493 = int_to_ptr.hbm [resolvable:$true] %s492
          %s494 = sshll.u32 %s486, 4
          %s495 = int_to_ptr.vmem [resolvable:$true] %s494
          %500 = dma.hbm_to_vmem [thread:$0]  %s493, 2048, %s495, %s483, 128, 128, 8
        $region64: #{tpu_custom_call.1} parent=59 // pred_fallthru
          _
        // Predicated region
        $region65: #{tpu_custom_call.1} parent=59 // pred_check
          %p501 = pneg %p79
        $region66: #{tpu_custom_call.1} parent=59 // pred_check_branch
          %503 = sbr.rel (%p501) target = $region68
        $region67: #{tpu_custom_call.1} parent=59 // pred_region
          %s504 = sand.u32 %s33, 1
          %s505 = scalar_lea.sflag [#allocation6], %s504
          %s506 = sand.u32 %s69, 1
          %s507 = smul.addr %s506, 128
          %s508 = scalar_lea.vmem [#allocation5], %s507
          %510 = vsyncadd %s505, 0
          %s511 = smul.addr %s33, 16
          %s512 = smul.addr %s511, 8
          %s513 = scalar_lea.hbm %s1, %s512
          %s514 = sshll.u32 %s513, 4
          %s515 = int_to_ptr.hbm [resolvable:$true] %s514
          %s516 = sshll.u32 %s508, 4
          %s517 = int_to_ptr.vmem [resolvable:$true] %s516
          %522 = dma.hbm_to_vmem [thread:$0]  %s515, 2048, %s517, %s505, 128, 128, 8
        $region68: #{tpu_custom_call.1} parent=59 // pred_fallthru
          _
        // Predicated region
        $region69: #{tpu_custom_call.1} parent=59 // pred_check
          %p523 = pneg %p105
        $region70: #{tpu_custom_call.1} parent=59 // pred_check_branch
          %525 = sbr.rel (%p523) target = $region72
        $region71: #{tpu_custom_call.1} parent=59 // pred_region
          %s526 = sand.u32 %s33, 1
          %s527 = scalar_lea.sflag [#allocation6], %s526
          %s528 = sand.u32 %s95, 1
          %s529 = smul.addr %s528, 128
          %s530 = scalar_lea.vmem [#allocation7], %s529
          %532 = vsyncadd %s527, 0
          %s533 = smul.addr %s33, 16
          %s534 = smul.addr %s533, 8
          %s535 = scalar_lea.hbm %s2, %s534
          %s536 = sshll.u32 %s535, 4
          %s537 = int_to_ptr.hbm [resolvable:$true] %s536
          %s538 = sshll.u32 %s530, 4
          %s539 = int_to_ptr.vmem [resolvable:$true] %s538
          %544 = dma.hbm_to_vmem [thread:$0]  %s537, 2048, %s539, %s527, 128, 128, 8
        $region72: #{tpu_custom_call.1} parent=59 // pred_fallthru
          _
      $region60: #{tpu_custom_call.1} parent=5 // pred_fallthru
        _
      %p545 = scmp.le.s32.totalorder 1, %s33
      %p546 = scmp.lt.s32.totalorder %s33, 3
      %p547 = pnand %p545, %p546
      %p548 = pneg %p547
      // Predicated region
      $region73: #{tpu_custom_call.1} parent=5 // pred_check
        _
      $region74: #{tpu_custom_call.1} parent=5 // pred_check_branch
        %550 = sbr.rel (%p547) target = $region76
      $region75: #{tpu_custom_call.1} parent=5 // pred_region
        %s551 = ssub.s32 %s33, 1
        %s552 = sand.u32 %s46, 1
        %s553 = scalar_lea.sflag [#allocation3], %s552
        %s554 = sand.u32 %s46, 1
        %s555 = smul.addr %s554, 128
        %s556 = scalar_lea.vmem [#allocation2], %s555
        // Predicated region
        $region77: #{tpu_custom_call.1} parent=75 // pred_check
          %p557 = pneg %p59
        $region78: #{tpu_custom_call.1} parent=75 // pred_check_branch
          %559 = sbr.rel (%p557) target = $region80
        $region79: #{tpu_custom_call.1} parent=75 // pred_region
          %561 = dma.done %s553, 2048
        $region80: #{tpu_custom_call.1} parent=75 // pred_fallthru
          _
        %s562 = sand.u32 %s38, 1
        %s563 = scalar_lea.sflag [#allocation6], %s562
        %s564 = sand.u32 %s72, 1
        %s565 = smul.addr %s564, 128
        %s566 = scalar_lea.vmem [#allocation5], %s565
        // Predicated region
        $region81: #{tpu_custom_call.1} parent=75 // pred_check
          %p567 = pneg %p85
        $region82: #{tpu_custom_call.1} parent=75 // pred_check_branch
          %569 = sbr.rel (%p567) target = $region84
        $region83: #{tpu_custom_call.1} parent=75 // pred_region
          %571 = dma.done %s563, 2048
        $region84: #{tpu_custom_call.1} parent=75 // pred_fallthru
          _
        %s572 = sand.u32 %s38, 1
        %s573 = scalar_lea.sflag [#allocation6], %s572
        %s574 = sand.u32 %s98, 1
        %s575 = smul.addr %s574, 128
        %s576 = scalar_lea.vmem [#allocation7], %s575
        // Predicated region
        $region85: #{tpu_custom_call.1} parent=75 // pred_check
          %p577 = pneg %p111
        $region86: #{tpu_custom_call.1} parent=75 // pred_check_branch
          %579 = sbr.rel (%p577) target = $region88
        $region87: #{tpu_custom_call.1} parent=75 // pred_region
          %581 = dma.done %s573, 2048
        $region88: #{tpu_custom_call.1} parent=75 // pred_fallthru
          _
        // Predicated region
        $region89: #{tpu_custom_call.1} parent=75 // pred_check
          %p582 = pneg %p174
        $region90: #{tpu_custom_call.1} parent=75 // pred_check_branch
          %584 = sbr.rel (%p582) target = $region92
        $region91: #{tpu_custom_call.1} parent=75 // pred_region
          %586 = dma.done [#allocation9], 2048
        $region92: #{tpu_custom_call.1} parent=75 // pred_fallthru
          _
        // Predicated region
        $region93: #{tpu_custom_call.1} parent=75 // pred_check
          %p587 = pneg %p216
        $region94: #{tpu_custom_call.1} parent=75 // pred_check_branch
          %589 = sbr.rel (%p587) target = $region96
        $region95: #{tpu_custom_call.1} parent=75 // pred_region
          %591 = dma.done [#allocation9], 2048
        $region96: #{tpu_custom_call.1} parent=75 // pred_fallthru
          _
        // Predicated region
        $region97: #{tpu_custom_call.1} parent=75 // pred_check
          %p592 = pneg %p300
        $region98: #{tpu_custom_call.1} parent=75 // pred_check_branch
          %594 = sbr.rel (%p592) target = $region100
        $region99: #{tpu_custom_call.1} parent=75 // pred_region
          %596 = dma.done [#allocation12], 2048
        $region100: #{tpu_custom_call.1} parent=75 // pred_fallthru
          _
        %s597 = sand.u32 %s46, 1
        %s598 = scalar_lea.sflag [#allocation3], %s597
        %s599 = sand.u32 %s46, 1
        %s600 = smul.addr %s599, 128
        %s601 = scalar_lea.vmem [#allocation2], %s600
        %p602 = pneg %p59
        %p603 = pneg %p56
        %s604 = sand.u32 %s38, 1
        %s605 = scalar_lea.sflag [#allocation6], %s604
        %s606 = sand.u32 %s72, 1
        %s607 = smul.addr %s606, 128
        %s608 = scalar_lea.vmem [#allocation5], %s607
        %p609 = pneg %p85
        %p610 = pneg %p82
        %s611 = sand.u32 %s38, 1
        %s612 = scalar_lea.sflag [#allocation6], %s611
        %s613 = sand.u32 %s98, 1
        %s614 = smul.addr %s613, 128
        %s615 = scalar_lea.vmem [#allocation7], %s614
        %p616 = pneg %p111
        %p617 = pneg %p108
        %p618 = pneg %p132
        %p619 = pneg %p129
        %p620 = pneg %p153
        %p621 = pneg %p150
        %p622 = pneg %p174
        %p623 = pneg %p171
        %p624 = pneg %p195
        %p625 = pneg %p192
        %p626 = pneg %p216
        %p627 = pneg %p213
        %p628 = pneg %p237
        %p629 = pneg %p234
        %p630 = pneg %p258
        %p631 = pneg %p255
        %p632 = pneg %p279
        %p633 = pneg %p276
        %p634 = pneg %p300
        %p635 = pneg %p297
        %p636 = pneg %p321
        %p637 = pneg %p318
        %p638 = pneg %p342
        %p639 = pneg %p339
        %p640 = pneg %p368
        %p641 = pneg %p365
        %s642 = sand.u32 %s355, 1
        %s643 = scalar_lea.sflag [#allocation4], %s642
        %s644 = sand.u32 %s355, 1
        %s645 = smul.addr %s644, 128
        %s646 = scalar_lea.vmem [#allocation13], %s645
        %p647 = pneg %p394
        %p648 = pneg %p391
        %p649 = scmp.lt.s32.totalorder %s38, 1
        %s650 = scalar_select %p649, %s38, 1
        %s651 = smul.addr %s650, 16
        %s652 = smul.addr %s651, 8
        %s653 = scalar_lea.vmem %s15, %s652
        %p654 = scmp.lt.s32.totalorder %s38, 1
        %s655 = scalar_select %p654, %s38, 1
        %s656 = smul.addr %s655, 16
        %s657 = smul.addr %s656, 8
        %s658 = scalar_lea.vmem %s15, %s657
        %v659 = vld [vmem:[%s556] sm:$0xff]
        %v660 = vld [vmem:[%s556 + $0x8] sm:$0xff]
        %v661 = vld [vmem:[%s556 + $0x10] sm:$0xff]
        %v662 = vld [vmem:[%s556 + $0x18] sm:$0xff]
        %v663 = vld [vmem:[%s556 + $0x20] sm:$0xff]
        %v664 = vld [vmem:[%s556 + $0x28] sm:$0xff]
        %v665 = vld [vmem:[%s556 + $0x30] sm:$0xff]
        %v666 = vld [vmem:[%s556 + $0x38] sm:$0xff]
        %v667 = vld [vmem:[%s556 + $0x40] sm:$0xff]
        %v668 = vld [vmem:[%s556 + $0x48] sm:$0xff]
        %v669 = vld [vmem:[%s556 + $0x50] sm:$0xff]
        %v670 = vld [vmem:[%s556 + $0x58] sm:$0xff]
        %v671 = vld [vmem:[%s556 + $0x60] sm:$0xff]
        %v672 = vld [vmem:[%s556 + $0x68] sm:$0xff]
        %v673 = vld [vmem:[%s556 + $0x70] sm:$0xff]
        %v674 = vld [vmem:[%s556 + $0x78] sm:$0xff]
        %v675 = vld [vmem:[%s566] sm:$0xff]
        %v676 = vld [vmem:[%s566 + $0x8] sm:$0xff]
        %v677 = vld [vmem:[%s566 + $0x10] sm:$0xff]
        %v678 = vld [vmem:[%s566 + $0x18] sm:$0xff]
        %v679 = vld [vmem:[%s566 + $0x20] sm:$0xff]
        %v680 = vld [vmem:[%s566 + $0x28] sm:$0xff]
        %v681 = vld [vmem:[%s566 + $0x30] sm:$0xff]
        %v682 = vld [vmem:[%s566 + $0x38] sm:$0xff]
        %v683 = vld [vmem:[%s566 + $0x40] sm:$0xff]
        %v684 = vld [vmem:[%s566 + $0x48] sm:$0xff]
        %v685 = vld [vmem:[%s566 + $0x50] sm:$0xff]
        %v686 = vld [vmem:[%s566 + $0x58] sm:$0xff]
        %v687 = vld [vmem:[%s566 + $0x60] sm:$0xff]
        %v688 = vld [vmem:[%s566 + $0x68] sm:$0xff]
        %v689 = vld [vmem:[%s566 + $0x70] sm:$0xff]
        %v690 = vld [vmem:[%s566 + $0x78] sm:$0xff]
        %v691 = vld [vmem:[%s576] sm:$0xff]
        %v692 = vld [vmem:[%s576 + $0x8] sm:$0xff]
        %v693 = vld [vmem:[%s576 + $0x10] sm:$0xff]
        %v694 = vld [vmem:[%s576 + $0x18] sm:$0xff]
        %v695 = vld [vmem:[%s576 + $0x20] sm:$0xff]
        %v696 = vld [vmem:[%s576 + $0x28] sm:$0xff]
        %v697 = vld [vmem:[%s576 + $0x30] sm:$0xff]
        %v698 = vld [vmem:[%s576 + $0x38] sm:$0xff]
        %v699 = vld [vmem:[%s576 + $0x40] sm:$0xff]
        %v700 = vld [vmem:[%s576 + $0x48] sm:$0xff]
        %v701 = vld [vmem:[%s576 + $0x50] sm:$0xff]
        %v702 = vld [vmem:[%s576 + $0x58] sm:$0xff]
        %v703 = vld [vmem:[%s576 + $0x60] sm:$0xff]
        %v704 = vld [vmem:[%s576 + $0x68] sm:$0xff]
        %v705 = vld [vmem:[%s576 + $0x70] sm:$0xff]
        %v706 = vld [vmem:[%s576 + $0x78] sm:$0xff]
        %v707 = vld [vmem:[%s3] sm:$0xff]
        %v708 = vld [vmem:[%s3 + $0x8] sm:$0xff]
        %v709 = vld [vmem:[%s3 + $0x10] sm:$0xff]
        %v710 = vld [vmem:[%s3 + $0x18] sm:$0xff]
        %v711 = vld [vmem:[%s3 + $0x20] sm:$0xff]
        %v712 = vld [vmem:[%s3 + $0x28] sm:$0xff]
        %v713 = vld [vmem:[%s3 + $0x30] sm:$0xff]
        %v714 = vld [vmem:[%s3 + $0x38] sm:$0xff]
        %v715 = vld [vmem:[%s3 + $0x40] sm:$0xff]
        %v716 = vld [vmem:[%s3 + $0x48] sm:$0xff]
        %v717 = vld [vmem:[%s3 + $0x50] sm:$0xff]
        %v718 = vld [vmem:[%s3 + $0x58] sm:$0xff]
        %v719 = vld [vmem:[%s3 + $0x60] sm:$0xff]
        %v720 = vld [vmem:[%s3 + $0x68] sm:$0xff]
        %v721 = vld [vmem:[%s3 + $0x70] sm:$0xff]
        %v722 = vld [vmem:[%s3 + $0x78] sm:$0xff]
        %v723 = vld [vmem:[%s4] sm:$0x1]
        %v725 = vperm.slane %v723, 0
        %727 = vmatpush.msra.mxu0 %v722
        %728 = vmatpush.msra.mxu0 %v721
        %729 = vmatpush.msra.mxu0 %v720
        %730 = vmatpush.msra.mxu0 %v719
        %731 = vmatpush.msra.mxu0 %v718
        %732 = vmatpush.msra.mxu0 %v717
        %733 = vmatpush.msra.mxu0 %v716
        %734 = vmatpush.msra.mxu0 %v715
        %735 = vmatpush.msra.mxu0 %v714
        %736 = vmatpush.msra.mxu0 %v713
        %737 = vmatpush.msra.mxu0 %v712
        %738 = vmatpush.msra.mxu0 %v711
        %739 = vmatpush.msra.mxu0 %v710
        %740 = vmatpush.msra.mxu0 %v709
        %741 = vmatpush.msra.mxu0 %v708
        %742 = vmatpush.msra.mxu0 %v707
        %743 = vmatmul.f32.gmra.mxu0 %v659
        %v744 = vpop.f32.mrf.mxu0
        %v745 = vadd.f32 %v725, %v744
        %746 = vmatmul.f32.gmra.mxu0 %v660
        %v747 = vpop.f32.mrf.mxu0
        %v748 = vadd.f32 %v725, %v747
        %749 = vmatmul.f32.gmra.mxu0 %v661
        %v750 = vpop.f32.mrf.mxu0
        %v751 = vadd.f32 %v725, %v750
        %752 = vmatmul.f32.gmra.mxu0 %v662
        %v753 = vpop.f32.mrf.mxu0
        %v754 = vadd.f32 %v725, %v753
        %755 = vmatmul.f32.gmra.mxu0 %v663
        %v756 = vpop.f32.mrf.mxu0
        %v757 = vadd.f32 %v725, %v756
        %758 = vmatmul.f32.gmra.mxu0 %v664
        %v759 = vpop.f32.mrf.mxu0
        %v760 = vadd.f32 %v725, %v759
        %761 = vmatmul.f32.gmra.mxu0 %v665
        %v762 = vpop.f32.mrf.mxu0
        %v763 = vadd.f32 %v725, %v762
        %764 = vmatmul.f32.gmra.mxu0 %v666
        %v765 = vpop.f32.mrf.mxu0
        %v766 = vadd.f32 %v725, %v765
        %767 = vmatmul.f32.gmra.mxu0 %v667
        %v768 = vpop.f32.mrf.mxu0
        %v769 = vadd.f32 %v725, %v768
        %770 = vmatmul.f32.gmra.mxu0 %v668
        %v771 = vpop.f32.mrf.mxu0
        %v772 = vadd.f32 %v725, %v771
        %773 = vmatmul.f32.gmra.mxu0 %v669
        %v774 = vpop.f32.mrf.mxu0
        %v775 = vadd.f32 %v725, %v774
        %776 = vmatmul.f32.gmra.mxu0 %v670
        %v777 = vpop.f32.mrf.mxu0
        %v778 = vadd.f32 %v725, %v777
        %779 = vmatmul.f32.gmra.mxu0 %v671
        %v780 = vpop.f32.mrf.mxu0
        %v781 = vadd.f32 %v725, %v780
        %782 = vmatmul.f32.gmra.mxu0 %v672
        %v783 = vpop.f32.mrf.mxu0
        %v784 = vadd.f32 %v725, %v783
        %785 = vmatmul.f32.gmra.mxu0 %v673
        %v786 = vpop.f32.mrf.mxu0
        %v787 = vadd.f32 %v725, %v786
        %788 = vmatmul.f32.gmra.mxu0 %v674
        %v789 = vpop.f32.mrf.mxu0
        %v790 = vadd.f32 %v725, %v789
        %791 = vdwg.mxu0
        %v792 = vld [vmem:[#allocation8] sm:$0xff]
        %v793 = vld [vmem:[#allocation8 + $0x8] sm:$0xff]
        %v794 = vld [vmem:[#allocation8 + $0x10] sm:$0xff]
        %v795 = vld [vmem:[#allocation8 + $0x18] sm:$0xff]
        %v796 = vld [vmem:[#allocation8 + $0x20] sm:$0xff]
        %v797 = vld [vmem:[#allocation8 + $0x28] sm:$0xff]
        %v798 = vld [vmem:[#allocation8 + $0x30] sm:$0xff]
        %v799 = vld [vmem:[#allocation8 + $0x38] sm:$0xff]
        %v800 = vld [vmem:[#allocation8 + $0x40] sm:$0xff]
        %v801 = vld [vmem:[#allocation8 + $0x48] sm:$0xff]
        %v802 = vld [vmem:[#allocation8 + $0x50] sm:$0xff]
        %v803 = vld [vmem:[#allocation8 + $0x58] sm:$0xff]
        %v804 = vld [vmem:[#allocation8 + $0x60] sm:$0xff]
        %v805 = vld [vmem:[#allocation8 + $0x68] sm:$0xff]
        %v806 = vld [vmem:[#allocation8 + $0x70] sm:$0xff]
        %v807 = vld [vmem:[#allocation8 + $0x78] sm:$0xff]
        %v808 = vld [vmem:[%s6] sm:$0x1]
        %v810 = vperm.slane %v808, 0
        %812 = vmatpush.msra.mxu0 %v807
        %813 = vmatpush.msra.mxu0 %v806
        %814 = vmatpush.msra.mxu0 %v805
        %815 = vmatpush.msra.mxu0 %v804
        %816 = vmatpush.msra.mxu0 %v803
        %817 = vmatpush.msra.mxu0 %v802
        %818 = vmatpush.msra.mxu0 %v801
        %819 = vmatpush.msra.mxu0 %v800
        %820 = vmatpush.msra.mxu0 %v799
        %821 = vmatpush.msra.mxu0 %v798
        %822 = vmatpush.msra.mxu0 %v797
        %823 = vmatpush.msra.mxu0 %v796
        %824 = vmatpush.msra.mxu0 %v795
        %825 = vmatpush.msra.mxu0 %v794
        %826 = vmatpush.msra.mxu0 %v793
        %827 = vmatpush.msra.mxu0 %v792
        %828 = vmatmul.f32.gmra.mxu0 %v675
        %v829 = vpop.f32.mrf.mxu0
        %v830 = vadd.f32 %v810, %v829
        %831 = vmatmul.f32.gmra.mxu0 %v676
        %v832 = vpop.f32.mrf.mxu0
        %v833 = vadd.f32 %v810, %v832
        %834 = vmatmul.f32.gmra.mxu0 %v677
        %v835 = vpop.f32.mrf.mxu0
        %v836 = vadd.f32 %v810, %v835
        %837 = vmatmul.f32.gmra.mxu0 %v678
        %v838 = vpop.f32.mrf.mxu0
        %v839 = vadd.f32 %v810, %v838
        %840 = vmatmul.f32.gmra.mxu0 %v679
        %v841 = vpop.f32.mrf.mxu0
        %v842 = vadd.f32 %v810, %v841
        %843 = vmatmul.f32.gmra.mxu0 %v680
        %v844 = vpop.f32.mrf.mxu0
        %v845 = vadd.f32 %v810, %v844
        %846 = vmatmul.f32.gmra.mxu0 %v681
        %v847 = vpop.f32.mrf.mxu0
        %v848 = vadd.f32 %v810, %v847
        %849 = vmatmul.f32.gmra.mxu0 %v682
        %v850 = vpop.f32.mrf.mxu0
        %v851 = vadd.f32 %v810, %v850
        %852 = vmatmul.f32.gmra.mxu0 %v683
        %v853 = vpop.f32.mrf.mxu0
        %v854 = vadd.f32 %v810, %v853
        %855 = vmatmul.f32.gmra.mxu0 %v684
        %v856 = vpop.f32.mrf.mxu0
        %v857 = vadd.f32 %v810, %v856
        %858 = vmatmul.f32.gmra.mxu0 %v685
        %v859 = vpop.f32.mrf.mxu0
        %v860 = vadd.f32 %v810, %v859
        %861 = vmatmul.f32.gmra.mxu0 %v686
        %v862 = vpop.f32.mrf.mxu0
        %v863 = vadd.f32 %v810, %v862
        %864 = vmatmul.f32.gmra.mxu0 %v687
        %v865 = vpop.f32.mrf.mxu0
        %v866 = vadd.f32 %v810, %v865
        %867 = vmatmul.f32.gmra.mxu0 %v688
        %v868 = vpop.f32.mrf.mxu0
        %v869 = vadd.f32 %v810, %v868
        %870 = vmatmul.f32.gmra.mxu0 %v689
        %v871 = vpop.f32.mrf.mxu0
        %v872 = vadd.f32 %v810, %v871
        %873 = vmatmul.f32.gmra.mxu0 %v690
        %v874 = vpop.f32.mrf.mxu0
        %v875 = vadd.f32 %v810, %v874
        %876 = vdwg.mxu0
        %v877 = vld [vmem:[#allocation10] sm:$0xff]
        %v878 = vld [vmem:[#allocation10 + $0x8] sm:$0xff]
        %v879 = vld [vmem:[#allocation10 + $0x10] sm:$0xff]
        %v880 = vld [vmem:[#allocation10 + $0x18] sm:$0xff]
        %v881 = vld [vmem:[#allocation10 + $0x20] sm:$0xff]
        %v882 = vld [vmem:[#allocation10 + $0x28] sm:$0xff]
        %v883 = vld [vmem:[#allocation10 + $0x30] sm:$0xff]
        %v884 = vld [vmem:[#allocation10 + $0x38] sm:$0xff]
        %v885 = vld [vmem:[#allocation10 + $0x40] sm:$0xff]
        %v886 = vld [vmem:[#allocation10 + $0x48] sm:$0xff]
        %v887 = vld [vmem:[#allocation10 + $0x50] sm:$0xff]
        %v888 = vld [vmem:[#allocation10 + $0x58] sm:$0xff]
        %v889 = vld [vmem:[#allocation10 + $0x60] sm:$0xff]
        %v890 = vld [vmem:[#allocation10 + $0x68] sm:$0xff]
        %v891 = vld [vmem:[#allocation10 + $0x70] sm:$0xff]
        %v892 = vld [vmem:[#allocation10 + $0x78] sm:$0xff]
        %v893 = vld [vmem:[%s8] sm:$0x1]
        %v895 = vperm.slane %v893, 0
        %897 = vmatpush.msra.mxu0 %v892
        %898 = vmatpush.msra.mxu0 %v891
        %899 = vmatpush.msra.mxu0 %v890
        %900 = vmatpush.msra.mxu0 %v889
        %901 = vmatpush.msra.mxu0 %v888
        %902 = vmatpush.msra.mxu0 %v887
        %903 = vmatpush.msra.mxu0 %v886
        %904 = vmatpush.msra.mxu0 %v885
        %905 = vmatpush.msra.mxu0 %v884
        %906 = vmatpush.msra.mxu0 %v883
        %907 = vmatpush.msra.mxu0 %v882
        %908 = vmatpush.msra.mxu0 %v881
        %909 = vmatpush.msra.mxu0 %v880
        %910 = vmatpush.msra.mxu0 %v879
        %911 = vmatpush.msra.mxu0 %v878
        %912 = vmatpush.msra.mxu0 %v877
        %913 = vmatmul.f32.gmra.mxu0 %v691
        %v914 = vpop.f32.mrf.mxu0
        %v915 = vadd.f32 %v895, %v914
        %916 = vmatmul.f32.gmra.mxu0 %v692
        %v917 = vpop.f32.mrf.mxu0
        %v918 = vadd.f32 %v895, %v917
        %919 = vmatmul.f32.gmra.mxu0 %v693
        %v920 = vpop.f32.mrf.mxu0
        %v921 = vadd.f32 %v895, %v920
        %922 = vmatmul.f32.gmra.mxu0 %v694
        %v923 = vpop.f32.mrf.mxu0
        %v924 = vadd.f32 %v895, %v923
        %925 = vmatmul.f32.gmra.mxu0 %v695
        %v926 = vpop.f32.mrf.mxu0
        %v927 = vadd.f32 %v895, %v926
        %928 = vmatmul.f32.gmra.mxu0 %v696
        %v929 = vpop.f32.mrf.mxu0
        %v930 = vadd.f32 %v895, %v929
        %931 = vmatmul.f32.gmra.mxu0 %v697
        %v932 = vpop.f32.mrf.mxu0
        %v933 = vadd.f32 %v895, %v932
        %934 = vmatmul.f32.gmra.mxu0 %v698
        %v935 = vpop.f32.mrf.mxu0
        %v936 = vadd.f32 %v895, %v935
        %937 = vmatmul.f32.gmra.mxu0 %v699
        %v938 = vpop.f32.mrf.mxu0
        %v939 = vadd.f32 %v895, %v938
        %940 = vmatmul.f32.gmra.mxu0 %v700
        %v941 = vpop.f32.mrf.mxu0
        %v942 = vadd.f32 %v895, %v941
        %943 = vmatmul.f32.gmra.mxu0 %v701
        %v944 = vpop.f32.mrf.mxu0
        %v945 = vadd.f32 %v895, %v944
        %946 = vmatmul.f32.gmra.mxu0 %v702
        %v947 = vpop.f32.mrf.mxu0
        %v948 = vadd.f32 %v895, %v947
        %949 = vmatmul.f32.gmra.mxu0 %v703
        %v950 = vpop.f32.mrf.mxu0
        %v951 = vadd.f32 %v895, %v950
        %952 = vmatmul.f32.gmra.mxu0 %v704
        %v953 = vpop.f32.mrf.mxu0
        %v954 = vadd.f32 %v895, %v953
        %955 = vmatmul.f32.gmra.mxu0 %v705
        %v956 = vpop.f32.mrf.mxu0
        %v957 = vadd.f32 %v895, %v956
        %958 = vmatmul.f32.gmra.mxu0 %v706
        %v959 = vpop.f32.mrf.mxu0
        %v960 = vadd.f32 %v895, %v959
        %961 = vdwg.mxu0
        %v962 = vld [vmem:[%s9] sm:$0xff]
        %v963 = vld [vmem:[%s9 + $0x8] sm:$0xff]
        %v964 = vld [vmem:[%s9 + $0x10] sm:$0xff]
        %v965 = vld [vmem:[%s9 + $0x18] sm:$0xff]
        %v966 = vld [vmem:[%s9 + $0x20] sm:$0xff]
        %v967 = vld [vmem:[%s9 + $0x28] sm:$0xff]
        %v968 = vld [vmem:[%s9 + $0x30] sm:$0xff]
        %v969 = vld [vmem:[%s9 + $0x38] sm:$0xff]
        %v970 = vld [vmem:[%s9 + $0x40] sm:$0xff]
        %v971 = vld [vmem:[%s9 + $0x48] sm:$0xff]
        %v972 = vld [vmem:[%s9 + $0x50] sm:$0xff]
        %v973 = vld [vmem:[%s9 + $0x58] sm:$0xff]
        %v974 = vld [vmem:[%s9 + $0x60] sm:$0xff]
        %v975 = vld [vmem:[%s9 + $0x68] sm:$0xff]
        %v976 = vld [vmem:[%s9 + $0x70] sm:$0xff]
        %v977 = vld [vmem:[%s9 + $0x78] sm:$0xff]
        %v978 = vld [vmem:[%s10] sm:$0x1]
        %v980 = vperm.slane %v978, 0
        %982 = vmatpush.msra.mxu0 %v977
        %983 = vmatpush.msra.mxu0 %v976
        %984 = vmatpush.msra.mxu0 %v975
        %985 = vmatpush.msra.mxu0 %v974
        %986 = vmatpush.msra.mxu0 %v973
        %987 = vmatpush.msra.mxu0 %v972
        %988 = vmatpush.msra.mxu0 %v971
        %989 = vmatpush.msra.mxu0 %v970
        %990 = vmatpush.msra.mxu0 %v969
        %991 = vmatpush.msra.mxu0 %v968
        %992 = vmatpush.msra.mxu0 %v967
        %993 = vmatpush.msra.mxu0 %v966
        %994 = vmatpush.msra.mxu0 %v965
        %995 = vmatpush.msra.mxu0 %v964
        %996 = vmatpush.msra.mxu0 %v963
        %997 = vmatpush.msra.mxu0 %v962
        %998 = vmatmul.f32.gmra.mxu0 %v745
        %v999 = vpop.f32.mrf.mxu0
        %v1000 = vadd.f32 %v980, %v999
        %1001 = vmatmul.f32.gmra.mxu0 %v748
        %v1002 = vpop.f32.mrf.mxu0
        %v1003 = vadd.f32 %v980, %v1002
        %1004 = vmatmul.f32.gmra.mxu0 %v751
        %v1005 = vpop.f32.mrf.mxu0
        %v1006 = vadd.f32 %v980, %v1005
        %1007 = vmatmul.f32.gmra.mxu0 %v754
        %v1008 = vpop.f32.mrf.mxu0
        %v1009 = vadd.f32 %v980, %v1008
        %1010 = vmatmul.f32.gmra.mxu0 %v757
        %v1011 = vpop.f32.mrf.mxu0
        %v1012 = vadd.f32 %v980, %v1011
        %1013 = vmatmul.f32.gmra.mxu0 %v760
        %v1014 = vpop.f32.mrf.mxu0
        %v1015 = vadd.f32 %v980, %v1014
        %1016 = vmatmul.f32.gmra.mxu0 %v763
        %v1017 = vpop.f32.mrf.mxu0
        %v1018 = vadd.f32 %v980, %v1017
        %1019 = vmatmul.f32.gmra.mxu0 %v766
        %v1020 = vpop.f32.mrf.mxu0
        %v1021 = vadd.f32 %v980, %v1020
        %1022 = vmatmul.f32.gmra.mxu0 %v769
        %v1023 = vpop.f32.mrf.mxu0
        %v1024 = vadd.f32 %v980, %v1023
        %1025 = vmatmul.f32.gmra.mxu0 %v772
        %v1026 = vpop.f32.mrf.mxu0
        %v1027 = vadd.f32 %v980, %v1026
        %1028 = vmatmul.f32.gmra.mxu0 %v775
        %v1029 = vpop.f32.mrf.mxu0
        %v1030 = vadd.f32 %v980, %v1029
        %1031 = vmatmul.f32.gmra.mxu0 %v778
        %v1032 = vpop.f32.mrf.mxu0
        %v1033 = vadd.f32 %v980, %v1032
        %1034 = vmatmul.f32.gmra.mxu0 %v781
        %v1035 = vpop.f32.mrf.mxu0
        %v1036 = vadd.f32 %v980, %v1035
        %1037 = vmatmul.f32.gmra.mxu0 %v784
        %v1038 = vpop.f32.mrf.mxu0
        %v1039 = vadd.f32 %v980, %v1038
        %1040 = vmatmul.f32.gmra.mxu0 %v787
        %v1041 = vpop.f32.mrf.mxu0
        %v1042 = vadd.f32 %v980, %v1041
        %1043 = vmatmul.f32.gmra.mxu0 %v790
        %v1044 = vpop.f32.mrf.mxu0
        %v1045 = vadd.f32 %v980, %v1044
        %1046 = vdwg.mxu0
        %v1047 = vmul.f32 %v1000, 0.17677669
        %v1048 = vmul.f32 %v1003, 0.17677669
        %v1049 = vmul.f32 %v1006, 0.17677669
        %v1050 = vmul.f32 %v1009, 0.17677669
        %v1051 = vmul.f32 %v1012, 0.17677669
        %v1052 = vmul.f32 %v1015, 0.17677669
        %v1053 = vmul.f32 %v1018, 0.17677669
        %v1054 = vmul.f32 %v1021, 0.17677669
        %v1055 = vmul.f32 %v1024, 0.17677669
        %v1056 = vmul.f32 %v1027, 0.17677669
        %v1057 = vmul.f32 %v1030, 0.17677669
        %v1058 = vmul.f32 %v1033, 0.17677669
        %v1059 = vmul.f32 %v1036, 0.17677669
        %v1060 = vmul.f32 %v1039, 0.17677669
        %v1061 = vmul.f32 %v1042, 0.17677669
        %v1062 = vmul.f32 %v1045, 0.17677669
        %vm1063 = vcmask 31744
        %v1064 = vsel %vm1063, %v1047, -inf
        %v1065 = vsel %vm1063, %v1048, -inf
        %v1066 = vsel %vm1063, %v1049, -inf
        %v1067 = vsel %vm1063, %v1050, -inf
        %v1068 = vsel %vm1063, %v1051, -inf
        %v1069 = vmax.f32 %v1064, %v1068
        %v1070 = vsel %vm1063, %v1052, -inf
        %v1071 = vmax.f32 %v1065, %v1070
        %v1072 = vsel %vm1063, %v1053, -inf
        %v1073 = vmax.f32 %v1066, %v1072
        %v1074 = vsel %vm1063, %v1054, -inf
        %v1075 = vmax.f32 %v1067, %v1074
        %v1076 = vsel %vm1063, %v1055, -inf
        %v1077 = vmax.f32 %v1069, %v1076
        %v1078 = vsel %vm1063, %v1056, -inf
        %v1079 = vmax.f32 %v1071, %v1078
        %v1080 = vsel %vm1063, %v1057, -inf
        %v1081 = vmax.f32 %v1073, %v1080
        %v1082 = vsel %vm1063, %v1058, -inf
        %v1083 = vmax.f32 %v1075, %v1082
        %v1084 = vsel %vm1063, %v1059, -inf
        %v1085 = vmax.f32 %v1077, %v1084
        %v1086 = vsel %vm1063, %v1060, -inf
        %v1087 = vmax.f32 %v1079, %v1086
        %v1088 = vsel %vm1063, %v1061, -inf
        %v1089 = vmax.f32 %v1081, %v1088
        %v1090 = vsel %vm1063, %v1062, -inf
        %v1091 = vmax.f32 %v1083, %v1090
        %v1092 = vmax.f32 %v1085, %v1087
        %v1093 = vmax.f32 %v1089, %v1091
        %v1094 = vmax.f32 %v1092, %v1093
        %v1095 = vrot.slane %v1094, 4
        %v1096 = vmax.f32 %v1094, %v1095
        %v1097 = vrot.slane %v1096, 2
        %v1098 = vmax.f32 %v1096, %v1097
        %v1099 = vrot.slane %v1098, 1
        %v1100 = vmax.f32 %v1098, %v1099
        %v1101 = vsub.f32 %v1047, %v1100
        %v1102 = vsub.f32 %v1048, %v1100
        %v1103 = vsub.f32 %v1049, %v1100
        %v1104 = vsub.f32 %v1050, %v1100
        %v1105 = vsub.f32 %v1051, %v1100
        %v1106 = vsub.f32 %v1052, %v1100
        %v1107 = vsub.f32 %v1053, %v1100
        %v1108 = vsub.f32 %v1054, %v1100
        %v1109 = vsub.f32 %v1055, %v1100
        %v1110 = vsub.f32 %v1056, %v1100
        %v1111 = vsub.f32 %v1057, %v1100
        %v1112 = vsub.f32 %v1058, %v1100
        %v1113 = vsub.f32 %v1059, %v1100
        %v1114 = vsub.f32 %v1060, %v1100
        %v1115 = vsub.f32 %v1061, %v1100
        %v1116 = vsub.f32 %v1062, %v1100
        %v1117 = vmul.f32 %v1101, 1.442695
        %v1118 = vpow.pop %v1117
        %v1119 = vmul.f32 %v1102, 1.442695
        %v1120 = vpow.pop %v1119
        %v1121 = vmul.f32 %v1103, 1.442695
        %v1122 = vpow.pop %v1121
        %v1123 = vmul.f32 %v1104, 1.442695
        %v1124 = vpow.pop %v1123
        %v1125 = vmul.f32 %v1105, 1.442695
        %v1126 = vpow.pop %v1125
        %v1127 = vmul.f32 %v1106, 1.442695
        %v1128 = vpow.pop %v1127
        %v1129 = vmul.f32 %v1107, 1.442695
        %v1130 = vpow.pop %v1129
        %v1131 = vmul.f32 %v1108, 1.442695
        %v1132 = vpow.pop %v1131
        %v1133 = vmul.f32 %v1109, 1.442695
        %v1134 = vpow.pop %v1133
        %v1135 = vmul.f32 %v1110, 1.442695
        %v1136 = vpow.pop %v1135
        %v1137 = vmul.f32 %v1111, 1.442695
        %v1138 = vpow.pop %v1137
        %v1139 = vmul.f32 %v1112, 1.442695
        %v1140 = vpow.pop %v1139
        %v1141 = vmul.f32 %v1113, 1.442695
        %v1142 = vpow.pop %v1141
        %v1143 = vmul.f32 %v1114, 1.442695
        %v1144 = vpow.pop %v1143
        %v1145 = vmul.f32 %v1115, 1.442695
        %v1146 = vpow.pop %v1145
        %v1147 = vmul.f32 %v1116, 1.442695
        %v1148 = vpow.pop %v1147
        %v1149 = vsel %vm1063, %v1118, 0.0
        %v1150 = vsel %vm1063, %v1120, 0.0
        %v1151 = vadd.f32 %v1149, %v1150
        %v1152 = vsel %vm1063, %v1122, 0.0
        %v1153 = vadd.f32 %v1151, %v1152
        %v1154 = vsel %vm1063, %v1124, 0.0
        %v1155 = vadd.f32 %v1153, %v1154
        %v1156 = vsel %vm1063, %v1126, 0.0
        %v1157 = vadd.f32 %v1155, %v1156
        %v1158 = vsel %vm1063, %v1128, 0.0
        %v1159 = vadd.f32 %v1157, %v1158
        %v1160 = vsel %vm1063, %v1130, 0.0
        %v1161 = vadd.f32 %v1159, %v1160
        %v1162 = vsel %vm1063, %v1132, 0.0
        %v1163 = vadd.f32 %v1161, %v1162
        %v1164 = vsel %vm1063, %v1134, 0.0
        %v1165 = vadd.f32 %v1163, %v1164
        %v1166 = vsel %vm1063, %v1136, 0.0
        %v1167 = vadd.f32 %v1165, %v1166
        %v1168 = vsel %vm1063, %v1138, 0.0
        %v1169 = vadd.f32 %v1167, %v1168
        %v1170 = vsel %vm1063, %v1140, 0.0
        %v1171 = vadd.f32 %v1169, %v1170
        %v1172 = vsel %vm1063, %v1142, 0.0
        %v1173 = vadd.f32 %v1171, %v1172
        %v1174 = vsel %vm1063, %v1144, 0.0
        %v1175 = vadd.f32 %v1173, %v1174
        %v1176 = vsel %vm1063, %v1146, 0.0
        %v1177 = vadd.f32 %v1175, %v1176
        %v1178 = vsel %vm1063, %v1148, 0.0
        %v1179 = vadd.f32 %v1177, %v1178
        %v1180 = vrot.slane %v1179, 4
        %v1181 = vadd.f32 %v1179, %v1180
        %v1182 = vrot.slane %v1181, 2
        %v1183 = vadd.f32 %v1181, %v1182
        %v1184 = vrot.slane %v1183, 1
        %v1185 = vadd.f32 %v1183, %v1184
        %v1186 = vrcp.pop %v1185
        %v1187 = vmul.f32 %v1185, %v1186
        %v1188 = vsub.f32 1.0, %v1187
        %v1189 = vmul.f32 %v1186, %v1188
        %v1190 = vadd.f32 %v1186, %v1189
        %vm1191 = vweird.f32 %v1185
        %vm1192 = vweird.f32 %v1186
        %vm1193 = vmor %vm1191, %vm1192
        %v1194 = vsel %vm1193, %v1186, %v1190
        %v1195 = vand.u32 2147483647, %v1185
        %vm1196 = vcmp.eq.f32.partialorder %v1195, 8.507059e+37
        %v1197 = vand.u32 %v1185, 2147483648
        %v1198 = vor.u32 1.1754944e-38, %v1197
        %v1199 = vsel %vm1196, %v1198, %v1194
        %v1200 = vmul.f32 %v1118, %v1199
        %v1201 = vmul.f32 %v1120, %v1199
        %v1202 = vmul.f32 %v1122, %v1199
        %v1203 = vmul.f32 %v1124, %v1199
        %v1204 = vmul.f32 %v1126, %v1199
        %v1205 = vmul.f32 %v1128, %v1199
        %v1206 = vmul.f32 %v1130, %v1199
        %v1207 = vmul.f32 %v1132, %v1199
        %v1208 = vmul.f32 %v1134, %v1199
        %v1209 = vmul.f32 %v1136, %v1199
        %v1210 = vmul.f32 %v1138, %v1199
        %v1211 = vmul.f32 %v1140, %v1199
        %v1212 = vmul.f32 %v1142, %v1199
        %v1213 = vmul.f32 %v1144, %v1199
        %v1214 = vmul.f32 %v1146, %v1199
        %v1215 = vmul.f32 %v1148, %v1199
        %1216 = vst.msk [vmem:[%s658] sm:$0xff] %vm1063, %v1200
        %1217 = vst.msk [vmem:[%s658 + $0x8] sm:$0xff] %vm1063, %v1201
        %1218 = vst.msk [vmem:[%s658 + $0x10] sm:$0xff] %vm1063, %v1202
        %1219 = vst.msk [vmem:[%s658 + $0x18] sm:$0xff] %vm1063, %v1203
        %1220 = vst.msk [vmem:[%s658 + $0x20] sm:$0xff] %vm1063, %v1204
        %1221 = vst.msk [vmem:[%s658 + $0x28] sm:$0xff] %vm1063, %v1205
        %1222 = vst.msk [vmem:[%s658 + $0x30] sm:$0xff] %vm1063, %v1206
        %1223 = vst.msk [vmem:[%s658 + $0x38] sm:$0xff] %vm1063, %v1207
        %1224 = vst.msk [vmem:[%s658 + $0x40] sm:$0xff] %vm1063, %v1208
        %1225 = vst.msk [vmem:[%s658 + $0x48] sm:$0xff] %vm1063, %v1209
        %1226 = vst.msk [vmem:[%s658 + $0x50] sm:$0xff] %vm1063, %v1210
        %1227 = vst.msk [vmem:[%s658 + $0x58] sm:$0xff] %vm1063, %v1211
        %1228 = vst.msk [vmem:[%s658 + $0x60] sm:$0xff] %vm1063, %v1212
        %1229 = vst.msk [vmem:[%s658 + $0x68] sm:$0xff] %vm1063, %v1213
        %1230 = vst.msk [vmem:[%s658 + $0x70] sm:$0xff] %vm1063, %v1214
        %1231 = vst.msk [vmem:[%s658 + $0x78] sm:$0xff] %vm1063, %v1215
        %v1232 = vld [vmem:[%s13] sm:$0xf]
        %v1234 = vsel %vm1063, %v1200, 0
        %v1237 = vsel %vm1063, %v1201, 0
        %v1240 = vsel %vm1063, %v1202, 0
        %v1243 = vsel %vm1063, %v1203, 0
        %v1246 = vsel %vm1063, %v1204, 0
        %v1249 = vsel %vm1063, %v1205, 0
        %v1252 = vsel %vm1063, %v1206, 0
        %v1255 = vsel %vm1063, %v1207, 0
        %v1258 = vsel %vm1063, %v1208, 0
        %v1261 = vsel %vm1063, %v1209, 0
        %v1264 = vsel %vm1063, %v1210, 0
        %v1267 = vsel %vm1063, %v1211, 0
        %v1270 = vsel %vm1063, %v1212, 0
        %v1273 = vsel %vm1063, %v1213, 0
        %v1276 = vsel %vm1063, %v1214, 0
        %v1279 = vsel %vm1063, %v1215, 0
        %vm1281 = vcmask 1043456
        %v1283 = vsel %vm1281, %v1232, 0
        %1285 = vmatpush.msra.mxu0 0.0
        %1286 = vmatpush.msra.mxu0 0.0
        %1287 = vmatpush.msra.mxu0 0.0
        %1288 = vmatpush.msra.mxu0 0.0
        %1289 = vmatpush.msra.mxu0 0.0
        %1290 = vmatpush.msra.mxu0 0.0
        %1291 = vmatpush.msra.mxu0 0.0
        %1292 = vmatpush.msra.mxu0 0.0
        %1293 = vmatpush.msra.mxu0 0.0
        %1294 = vmatpush.msra.mxu0 0.0
        %1295 = vmatpush.msra.mxu0 0.0
        %1296 = vmatpush.msra.mxu0 0.0
        %1297 = vmatpush.msra.mxu0 0.0
        %1298 = vmatpush.msra.mxu0 0.0
        %1299 = vmatpush.msra.mxu0 0.0
        %1300 = vmatpush.msra.mxu0 %v1283
        %1301 = vmatmul.f32.gmra.mxu0 %v1234
        %v1302 = vpop.f32.mrf.mxu0
        %v1303 = vadd.f32 0.0, %v1302
        %1304 = vmatmul.f32.gmra.mxu0 %v1237
        %v1305 = vpop.f32.mrf.mxu0
        %v1306 = vadd.f32 0.0, %v1305
        %1307 = vmatmul.f32.gmra.mxu0 %v1240
        %v1308 = vpop.f32.mrf.mxu0
        %v1309 = vadd.f32 0.0, %v1308
        %1310 = vmatmul.f32.gmra.mxu0 %v1243
        %v1311 = vpop.f32.mrf.mxu0
        %v1312 = vadd.f32 0.0, %v1311
        %1313 = vmatmul.f32.gmra.mxu0 %v1246
        %v1314 = vpop.f32.mrf.mxu0
        %v1315 = vadd.f32 0.0, %v1314
        %1316 = vmatmul.f32.gmra.mxu0 %v1249
        %v1317 = vpop.f32.mrf.mxu0
        %v1318 = vadd.f32 0.0, %v1317
        %1319 = vmatmul.f32.gmra.mxu0 %v1252
        %v1320 = vpop.f32.mrf.mxu0
        %v1321 = vadd.f32 0.0, %v1320
        %1322 = vmatmul.f32.gmra.mxu0 %v1255
        %v1323 = vpop.f32.mrf.mxu0
        %v1324 = vadd.f32 0.0, %v1323
        %1325 = vmatmul.f32.gmra.mxu0 %v1258
        %v1326 = vpop.f32.mrf.mxu0
        %v1327 = vadd.f32 0.0, %v1326
        %1328 = vmatmul.f32.gmra.mxu0 %v1261
        %v1329 = vpop.f32.mrf.mxu0
        %v1330 = vadd.f32 0.0, %v1329
        %1331 = vmatmul.f32.gmra.mxu0 %v1264
        %v1332 = vpop.f32.mrf.mxu0
        %v1333 = vadd.f32 0.0, %v1332
        %1334 = vmatmul.f32.gmra.mxu0 %v1267
        %v1335 = vpop.f32.mrf.mxu0
        %v1336 = vadd.f32 0.0, %v1335
        %1337 = vmatmul.f32.gmra.mxu0 %v1270
        %v1338 = vpop.f32.mrf.mxu0
        %v1339 = vadd.f32 0.0, %v1338
        %1340 = vmatmul.f32.gmra.mxu0 %v1273
        %v1341 = vpop.f32.mrf.mxu0
        %v1342 = vadd.f32 0.0, %v1341
        %1343 = vmatmul.f32.gmra.mxu0 %v1276
        %v1344 = vpop.f32.mrf.mxu0
        %v1345 = vadd.f32 0.0, %v1344
        %1346 = vmatmul.f32.gmra.mxu0 %v1279
        %v1347 = vpop.f32.mrf.mxu0
        %v1348 = vadd.f32 0.0, %v1347
        %1349 = vdwg.mxu0
        %v1350 = vmul.f32 %v1303, %v745
        %v1351 = vmul.f32 %v1306, %v748
        %v1352 = vmul.f32 %v1309, %v751
        %v1353 = vmul.f32 %v1312, %v754
        %v1354 = vmul.f32 %v1315, %v757
        %v1355 = vmul.f32 %v1318, %v760
        %v1356 = vmul.f32 %v1321, %v763
        %v1357 = vmul.f32 %v1324, %v766
        %v1358 = vmul.f32 %v1327, %v769
        %v1359 = vmul.f32 %v1330, %v772
        %v1360 = vmul.f32 %v1333, %v775
        %v1361 = vmul.f32 %v1336, %v778
        %v1362 = vmul.f32 %v1339, %v781
        %v1363 = vmul.f32 %v1342, %v784
        %v1364 = vmul.f32 %v1345, %v787
        %v1365 = vmul.f32 %v1348, %v790
        %v1366 = vadd.f32 %v1350, %v1351
        %v1367 = vadd.f32 %v1366, %v1352
        %v1368 = vadd.f32 %v1367, %v1353
        %v1369 = vadd.f32 %v1368, %v1354
        %v1370 = vadd.f32 %v1369, %v1355
        %v1371 = vadd.f32 %v1370, %v1356
        %v1372 = vadd.f32 %v1371, %v1357
        %v1373 = vadd.f32 %v1372, %v1358
        %v1374 = vadd.f32 %v1373, %v1359
        %v1375 = vadd.f32 %v1374, %v1360
        %v1376 = vadd.f32 %v1375, %v1361
        %v1377 = vadd.f32 %v1376, %v1362
        %v1378 = vadd.f32 %v1377, %v1363
        %v1379 = vadd.f32 %v1378, %v1364
        %v1380 = vadd.f32 %v1379, %v1365
        %v1381 = vrot.slane %v1380, 4
        %v1382 = vadd.f32 %v1380, %v1381
        %v1383 = vrot.slane %v1382, 2
        %v1384 = vadd.f32 %v1382, %v1383
        %v1385 = vrot.slane %v1384, 1
        %v1386 = vadd.f32 %v1384, %v1385
        %v1387 = vmul.f32 %v1386, %v830
        %v1388 = vmul.f32 %v1386, %v833
        %v1389 = vmul.f32 %v1386, %v836
        %v1390 = vmul.f32 %v1386, %v839
        %v1391 = vmul.f32 %v1386, %v842
        %v1392 = vmul.f32 %v1386, %v845
        %v1393 = vmul.f32 %v1386, %v848
        %v1394 = vmul.f32 %v1386, %v851
        %v1395 = vmul.f32 %v1386, %v854
        %v1396 = vmul.f32 %v1386, %v857
        %v1397 = vmul.f32 %v1386, %v860
        %v1398 = vmul.f32 %v1386, %v863
        %v1399 = vmul.f32 %v1386, %v866
        %v1400 = vmul.f32 %v1386, %v869
        %v1401 = vmul.f32 %v1386, %v872
        %v1402 = vmul.f32 %v1386, %v875
        %v1403 = vmul.f32 %v1387, %v915
        %v1404 = vmul.f32 %v1388, %v918
        %v1405 = vmul.f32 %v1389, %v921
        %v1406 = vmul.f32 %v1390, %v924
        %v1407 = vmul.f32 %v1391, %v927
        %v1408 = vmul.f32 %v1392, %v930
        %v1409 = vmul.f32 %v1393, %v933
        %v1410 = vmul.f32 %v1394, %v936
        %v1411 = vmul.f32 %v1395, %v939
        %v1412 = vmul.f32 %v1396, %v942
        %v1413 = vmul.f32 %v1397, %v945
        %v1414 = vmul.f32 %v1398, %v948
        %v1415 = vmul.f32 %v1399, %v951
        %v1416 = vmul.f32 %v1400, %v954
        %v1417 = vmul.f32 %v1401, %v957
        %v1418 = vmul.f32 %v1402, %v960
        %v1419 = vld [vmem:[#allocation11] sm:$0xff]
        %v1420 = vld [vmem:[#allocation11 + $0x8] sm:$0xff]
        %v1421 = vld [vmem:[#allocation11 + $0x10] sm:$0xff]
        %v1422 = vld [vmem:[#allocation11 + $0x18] sm:$0xff]
        %v1423 = vld [vmem:[#allocation11 + $0x20] sm:$0xff]
        %v1424 = vld [vmem:[#allocation11 + $0x28] sm:$0xff]
        %v1425 = vld [vmem:[#allocation11 + $0x30] sm:$0xff]
        %v1426 = vld [vmem:[#allocation11 + $0x38] sm:$0xff]
        %v1427 = vld [vmem:[#allocation11 + $0x40] sm:$0xff]
        %v1428 = vld [vmem:[#allocation11 + $0x48] sm:$0xff]
        %v1429 = vld [vmem:[#allocation11 + $0x50] sm:$0xff]
        %v1430 = vld [vmem:[#allocation11 + $0x58] sm:$0xff]
        %v1431 = vld [vmem:[#allocation11 + $0x60] sm:$0xff]
        %v1432 = vld [vmem:[#allocation11 + $0x68] sm:$0xff]
        %v1433 = vld [vmem:[#allocation11 + $0x70] sm:$0xff]
        %v1434 = vld [vmem:[#allocation11 + $0x78] sm:$0xff]
        %v1435 = vld [vmem:[%s12] sm:$0x1]
        %v1437 = vperm.slane %v1435, 0
        %1439 = vmatpush.msra.mxu0 %v1434
        %1440 = vmatpush.msra.mxu0 %v1433
        %1441 = vmatpush.msra.mxu0 %v1432
        %1442 = vmatpush.msra.mxu0 %v1431
        %1443 = vmatpush.msra.mxu0 %v1430
        %1444 = vmatpush.msra.mxu0 %v1429
        %1445 = vmatpush.msra.mxu0 %v1428
        %1446 = vmatpush.msra.mxu0 %v1427
        %1447 = vmatpush.msra.mxu0 %v1426
        %1448 = vmatpush.msra.mxu0 %v1425
        %1449 = vmatpush.msra.mxu0 %v1424
        %1450 = vmatpush.msra.mxu0 %v1423
        %1451 = vmatpush.msra.mxu0 %v1422
        %1452 = vmatpush.msra.mxu0 %v1421
        %1453 = vmatpush.msra.mxu0 %v1420
        %1454 = vmatpush.msra.mxu0 %v1419
        %1455 = vmatmul.f32.gmra.mxu0 %v1403
        %v1456 = vpop.f32.mrf.mxu0
        %v1457 = vadd.f32 %v1437, %v1456
        %1458 = vmatmul.f32.gmra.mxu0 %v1404
        %v1459 = vpop.f32.mrf.mxu0
        %v1460 = vadd.f32 %v1437, %v1459
        %1461 = vmatmul.f32.gmra.mxu0 %v1405
        %v1462 = vpop.f32.mrf.mxu0
        %v1463 = vadd.f32 %v1437, %v1462
        %1464 = vmatmul.f32.gmra.mxu0 %v1406
        %v1465 = vpop.f32.mrf.mxu0
        %v1466 = vadd.f32 %v1437, %v1465
        %1467 = vmatmul.f32.gmra.mxu0 %v1407
        %v1468 = vpop.f32.mrf.mxu0
        %v1469 = vadd.f32 %v1437, %v1468
        %1470 = vmatmul.f32.gmra.mxu0 %v1408
        %v1471 = vpop.f32.mrf.mxu0
        %v1472 = vadd.f32 %v1437, %v1471
        %1473 = vmatmul.f32.gmra.mxu0 %v1409
        %v1474 = vpop.f32.mrf.mxu0
        %v1475 = vadd.f32 %v1437, %v1474
        %1476 = vmatmul.f32.gmra.mxu0 %v1410
        %v1477 = vpop.f32.mrf.mxu0
        %v1478 = vadd.f32 %v1437, %v1477
        %1479 = vmatmul.f32.gmra.mxu0 %v1411
        %v1480 = vpop.f32.mrf.mxu0
        %v1481 = vadd.f32 %v1437, %v1480
        %1482 = vmatmul.f32.gmra.mxu0 %v1412
        %v1483 = vpop.f32.mrf.mxu0
        %v1484 = vadd.f32 %v1437, %v1483
        %1485 = vmatmul.f32.gmra.mxu0 %v1413
        %v1486 = vpop.f32.mrf.mxu0
        %v1487 = vadd.f32 %v1437, %v1486
        %1488 = vmatmul.f32.gmra.mxu0 %v1414
        %v1489 = vpop.f32.mrf.mxu0
        %v1490 = vadd.f32 %v1437, %v1489
        %1491 = vmatmul.f32.gmra.mxu0 %v1415
        %v1492 = vpop.f32.mrf.mxu0
        %v1493 = vadd.f32 %v1437, %v1492
        %1494 = vmatmul.f32.gmra.mxu0 %v1416
        %v1495 = vpop.f32.mrf.mxu0
        %v1496 = vadd.f32 %v1437, %v1495
        %1497 = vmatmul.f32.gmra.mxu0 %v1417
        %v1498 = vpop.f32.mrf.mxu0
        %v1499 = vadd.f32 %v1437, %v1498
        %1500 = vmatmul.f32.gmra.mxu0 %v1418
        %v1501 = vpop.f32.mrf.mxu0
        %v1502 = vadd.f32 %v1437, %v1501
        %1503 = vdwg.mxu0
        %1504 = vst [vmem:[%s646] sm:$0xff] %v1457
        %1505 = vst [vmem:[%s646 + $0x8] sm:$0xff] %v1460
        %1506 = vst [vmem:[%s646 + $0x10] sm:$0xff] %v1463
        %1507 = vst [vmem:[%s646 + $0x18] sm:$0xff] %v1466
        %1508 = vst [vmem:[%s646 + $0x20] sm:$0xff] %v1469
        %1509 = vst [vmem:[%s646 + $0x28] sm:$0xff] %v1472
        %1510 = vst [vmem:[%s646 + $0x30] sm:$0xff] %v1475
        %1511 = vst [vmem:[%s646 + $0x38] sm:$0xff] %v1478
        %1512 = vst [vmem:[%s646 + $0x40] sm:$0xff] %v1481
        %1513 = vst [vmem:[%s646 + $0x48] sm:$0xff] %v1484
        %1514 = vst [vmem:[%s646 + $0x50] sm:$0xff] %v1487
        %1515 = vst [vmem:[%s646 + $0x58] sm:$0xff] %v1490
        %1516 = vst [vmem:[%s646 + $0x60] sm:$0xff] %v1493
        %1517 = vst [vmem:[%s646 + $0x68] sm:$0xff] %v1496
        %1518 = vst [vmem:[%s646 + $0x70] sm:$0xff] %v1499
        %1519 = vst [vmem:[%s646 + $0x78] sm:$0xff] %v1502
        %s1520 = sand.u32 %s355, 1
        %s1521 = scalar_lea.sflag [#allocation4], %s1520
        %s1522 = sand.u32 %s355, 1
        %s1523 = smul.addr %s1522, 128
        %s1524 = scalar_lea.vmem [#allocation13], %s1523
        %p1525 = scmp.lt.s32.totalorder %s38, 1
        %s1526 = scalar_select %p1525, %s38, 1
        %s1527 = smul.addr %s1526, 16
        %s1528 = smul.addr %s1527, 8
        %s1529 = scalar_lea.vmem %s15, %s1528
        // Predicated region
        $region101: #{tpu_custom_call.1} parent=75 // pred_check
          %p1530 = pneg %p365
        $region102: #{tpu_custom_call.1} parent=75 // pred_check_branch
          %1532 = sbr.rel (%p1530) target = $region104
        $region103: #{tpu_custom_call.1} parent=75 // pred_region
          %1534 = vsyncadd %s1521, 0
          %s1535 = smul.addr %s38, 16
          %s1536 = smul.addr %s1535, 8
          %s1537 = scalar_lea.hbm %s14, %s1536
          %s1538 = sshll.u32 %s1524, 4
          %s1539 = int_to_ptr.vmem [resolvable:$true] %s1538
          %s1540 = sshll.u32 %s1537, 4
          %s1541 = int_to_ptr.hbm [resolvable:$true] %s1540
          %1546 = dma.vmem_to_hbm [thread:$0]  %s1539, 2048, %s1541, %s1521, 128, 128, 8
        $region104: #{tpu_custom_call.1} parent=75 // pred_fallthru
          _
        // Predicated region
        $region105: #{tpu_custom_call.1} parent=75 // pred_check
          %p1547 = pneg %p391
        $region106: #{tpu_custom_call.1} parent=75 // pred_check_branch
          %1549 = sbr.rel (%p1547) target = $region108
        $region107: #{tpu_custom_call.1} parent=75 // pred_region
          _
        $region108: #{tpu_custom_call.1} parent=75 // pred_fallthru
          _
      $region76: #{tpu_custom_call.1} parent=5 // pred_fallthru
        _
      %p1550 = scmp.le.s32.totalorder 2, %s33
      // Predicated region
      $region109: #{tpu_custom_call.1} parent=5 // pred_check
        %p1551 = pneg %p1550
      $region110: #{tpu_custom_call.1} parent=5 // pred_check_branch
        %1553 = sbr.rel (%p1551) target = $region112
      $region111: #{tpu_custom_call.1} parent=5 // pred_region
        %s1554 = ssub.s32 %s33, 2
        // Predicated region
        $region113: #{tpu_custom_call.1} parent=111 // pred_check
          %p1555 = pneg %p371
        $region114: #{tpu_custom_call.1} parent=111 // pred_check_branch
          %1557 = sbr.rel (%p1555) target = $region116
        $region115: #{tpu_custom_call.1} parent=111 // pred_region
          %s1558 = sand.u32 %s356, 1
          %s1559 = scalar_lea.sflag [#allocation4], %s1558
          %s1560 = sand.u32 %s356, 1
          %s1561 = smul.addr %s1560, 128
          %s1562 = scalar_lea.vmem [#allocation13], %s1561
          %1564 = dma.done %s1559, 2048
        $region116: #{tpu_custom_call.1} parent=111 // pred_fallthru
          _
        // Predicated region
        $region117: #{tpu_custom_call.1} parent=111 // pred_check
          %p1565 = pneg %p397
        $region118: #{tpu_custom_call.1} parent=111 // pred_check_branch
          %1567 = sbr.rel (%p1565) target = $region120
        $region119: #{tpu_custom_call.1} parent=111 // pred_region
          %p1568 = scmp.lt.s32.totalorder %s39, 1
          %s1569 = scalar_select %p1568, %s39, 1
          %s1570 = smul.addr %s1569, 16
          %s1571 = smul.addr %s1570, 8
          %s1572 = scalar_lea.vmem %s15, %s1571
        $region120: #{tpu_custom_call.1} parent=111 // pred_fallthru
          _
      $region112: #{tpu_custom_call.1} parent=5 // pred_fallthru
        _
    $region6: #{tpu_custom_call.1} parent=1 // loop_footer
      %s37 = sadd.s32 1, %s33
    $region7: #{tpu_custom_call.1} parent=1 // loop_footer_branch
      %32 = sbr.rel target = $region3
    $region8: #{tpu_custom_call.1} parent=1 // loop_exit
      _
    %1573 = vsyncpa [#allocation3], 1
    %s1574 = scalar_lea.sflag [#allocation3], 1
    %1575 = vsyncpa %s1574, 1
    %1576 = vsyncpa [#allocation6], 1
    %s1577 = scalar_lea.sflag [#allocation6], 1
    %1578 = vsyncpa %s1577, 1
    %1579 = vsyncpa [#allocation9], 1
    %1580 = vsyncpa [#allocation12], 1
    %1581 = vsyncpa [#allocation4], 1
    %s1582 = scalar_lea.sflag [#allocation4], 1
    %1583 = vsyncpa %s1582, 1

</llo_original>
